<compile_context>
chip_gen: v7x
topology: tpu7x:2x2x1
jax: 0.10.0
libtpu: 0.0.40
codegen_flags: <defaults>
</compile_context>

<pallas_src>
import math
import numpy as np

import jax
import jax.numpy as jnp
from jax.experimental import pallas as pl
from jax.experimental.pallas import tpu as pltpu

_EPS = 1e-5


def _round_up(n, m):
    return ((n + m - 1) // m) * m


# ----------------------------------------------------------------------------- kernel
def _make_kernel(lay):
    C, L, D = lay["C"], lay["L"], lay["D"]
    H, d_k = lay["H"], lay["d_k"]
    HK, d_h = H * d_k, D // H
    N1, M1, OUT = lay["N1"], lay["M1"], lay["OUT_PAD"]
    off = lay["off"]
    ocw, olncg, olncbp = off["cw"], off["lnc_g"], off["lncb_pos"]
    ofkw, om1w, od1w, od2w = off["fkw"], off["m1w"], off["d1w"], off["d2w"]

    def kernel(x_ref, vec_ref, mat_ref, o_ref):
        x = x_ref[...]                                       # (TB, L, C) f32
        TB = x.shape[0]

        # ---- inlayernorm: LayerNorm over channel dim ----
        mu = jnp.mean(x, axis=-1, keepdims=True)
        xc = x - mu
        var = jnp.mean(xc * xc, axis=-1, keepdims=True)
        xh = xc * jax.lax.rsqrt(var + _EPS) * vec_ref[0:1, 0:C] + vec_ref[1:2, 0:C]

        # ---- inconv: Conv1d(C->D, k=1) == channel matmul ----
        h = jnp.dot(xh.reshape(TB * L, C), mat_ref[ocw:ocw + C, 0:D],
                    preferred_element_type=jnp.float32) + vec_ref[2:3, 0:D]
        h = h.reshape(TB, L, D)

        # ---- LayerNorm((d_model, len_max_seq)): normalize jointly over (L, D) per sample ----
        # chained equal-size means == joint mean; hc is reused for variance and normalize.
        mu2 = jnp.mean(jnp.mean(h, axis=2, keepdims=True), axis=1, keepdims=True)
        hc = h - mu2
        var2 = jnp.mean(jnp.mean(hc * hc, axis=2, keepdims=True), axis=1, keepdims=True)
        # gamma * norm + (beta + positional_encoding)   (pos folded into beta at pack time)
        h = (hc * jax.lax.rsqrt(var2 + _EPS) * mat_ref[olncg:olncg + L, 0:D]
             + mat_ref[olncbp:olncbp + L, 0:D])

        # ---- fc1_k: keys, D -> H*d_k ----
        k = jnp.dot(h.reshape(TB * L, D), mat_ref[ofkw:ofkw + D, 0:HK],
                    preferred_element_type=jnp.float32) + vec_ref[3:4, 0:HK]
        k = k.reshape(TB, L, HK)

        # ---- LTAE master-query attention, per head on VPU/XLU ----
        # (1/sqrt(d_k) is folded into the packed query vector; attn dropout = identity in eval)
        kq = k * vec_ref[4:5, 0:HK]                          # (TB, L, H*d_k)
        heads = []
        for hh in range(H):
            s = jnp.sum(kq[:, :, hh * d_k:(hh + 1) * d_k], axis=2, keepdims=True)   # (TB,L,1)
            s = s - jnp.max(s, axis=1, keepdims=True)
            e = jnp.exp(s)
            a = e / jnp.sum(e, axis=1, keepdims=True)        # softmax over time
            heads.append(jnp.sum(a * h[:, :, hh * d_h:(hh + 1) * d_h], axis=1))     # (TB,d_h)
        out = jnp.concatenate(heads, axis=-1)                # (TB, D) = concat of heads

        # ---- LTAE mlp: Linear (BN1 folded in) -> ReLU ; dropout = identity ----
        z = jnp.dot(out, mat_ref[om1w:om1w + D, 0:N1],
                    preferred_element_type=jnp.float32) + vec_ref[5:6, 0:N1]
        z = jnp.maximum(z, 0.0)

        # ---- outlayernorm ----
        mu3 = jnp.mean(z, axis=-1, keepdims=True)
        zc = z - mu3
        var3 = jnp.mean(zc * zc, axis=-1, keepdims=True)
        z = zc * jax.lax.rsqrt(var3 + _EPS) * vec_ref[6:7, 0:N1] + vec_ref[7:8, 0:N1]

        # ---- decoder: Linear (BN2 folded in) -> ReLU, final Linear (lane-padded to 128) ----
        z = jnp.maximum(
            jnp.dot(z, mat_ref[od1w:od1w + N1, 0:M1],
                    preferred_element_type=jnp.float32) + vec_ref[8:9, 0:M1], 0.0)
        z = jnp.dot(z, mat_ref[od2w:od2w + M1, 0:OUT],
                    preferred_element_type=jnp.float32) + vec_ref[9:10, 0:OUT]
        o_ref[...] = z.astype(o_ref.dtype)

    return kernel


# ----------------------------------------------------------------------------- wrapper
def make_forward(layout, *, tb=8):
    """Build a jitted forward(x, vecs, mats). tb must be a multiple of 8."""
    kernel = _make_kernel(layout)
    L, C = layout["L"], layout["C"]
    OUT, M2 = layout["OUT_PAD"], layout["M2"]

    @jax.jit
    def forward(x, vecs, mats):
        B = x.shape[0]
        Bp = _round_up(max(B, tb), tb)
        if Bp != B:
            x_p = jnp.zeros((Bp, L, C), x.dtype).at[:B].set(x)
        else:
            x_p = x
        out = pl.pallas_call(
            kernel,
            out_shape=jax.ShapeDtypeStruct((Bp, OUT), jnp.float32),
            grid=(Bp // tb,),
            in_specs=[
                # batch-tiled activations (pipelined HBM fetch per grid step)
                pl.BlockSpec((tb, L, C), lambda i: (i, 0, 0)),
                # packed parameter slabs: index-invariant -> fetched once, VMEM-resident
                pl.BlockSpec(vecs.shape, lambda i: (0, 0)),
                pl.BlockSpec(mats.shape, lambda i: (0, 0)),
            ],
            out_specs=pl.BlockSpec((tb, OUT), lambda i: (i, 0)),
            compiler_params=pltpu.CompilerParams(
                dimension_semantics=("parallel",)),          # megacore / v7x 2-TC sharding
        )(x_p, vecs, mats)
        return out[:B, :M2]

    return forward


# ----------------------------------------------------------------------------- packing
def pack_params(p, *, C, L, D, H, d_k, n_neurons, mlp):
    """Fold eval-mode BNs / scales and pack everything into two VMEM slabs."""
    HK = H * d_k
    N1 = n_neurons[1]
    M1, M2 = mlp[1], mlp[2]
    OUT_PAD = _round_up(M2, 128)
    f = lambda a: np.asarray(a, np.float32)

    # --- fold eval-mode BatchNorms into the preceding Linears ---
    s1 = f(p["bn1g"]) / np.sqrt(f(p["bn1v"]) + _EPS)
    m1w = f(p["m1w"]) * s1
    m1b = (f(p["m1b"]) - f(p["bn1m"])) * s1 + f(p["bn1b"])
    s2 = f(p["bn2g"]) / np.sqrt(f(p["bn2v"]) + _EPS)
    d1w = f(p["d1w"]) * s2
    d1b = (f(p["d1b"]) - f(p["bn2m"])) * s2 + f(p["bn2b"])

    # --- fold 1/sqrt(d_k) into the master query; fold positional enc into LN beta ---
    qflat = (f(p["q"]) / math.sqrt(d_k)).reshape(1, HK)
    lncb_pos = f(p["lnc_b"]) + f(p["pos"])                   # (L, D)

    # --- zero-pad final Linear to a lane-dense (.., 128k) output ---
    d2w = np.zeros((M1, OUT_PAD), np.float32); d2w[:, :M2] = f(p["d2w"])
    d2b = np.zeros((1, OUT_PAD), np.float32);  d2b[:, :M2] = f(p["d2b"])

    W = _round_up(max(128, OUT_PAD, C, D, HK, N1, M1), 128)

    # --- pack all (1, n) vectors into one slab (one row each, zero lane-padded) ---
    vec_list = [f(p["lni_g"]), f(p["lni_b"]), f(p["cb"]), f(p["fkb"]), qflat,
                m1b, f(p["olng"]), f(p["olnb"]), d1b, d2b]
    vecs = np.zeros((len(vec_list), W), np.float32)
    for i, v in enumerate(vec_list):
        vecs[i, :v.shape[1]] = v[0]

    # --- pack all 2-D weights into one slab with 8-aligned row offsets ---
    mat_list = [("cw", f(p["cw"])), ("lnc_g", f(p["lnc_g"])), ("lncb_pos", lncb_pos),
                ("fkw", f(p["fkw"])), ("m1w", m1w), ("d1w", d1w), ("d2w", d2w)]
    off, rows = {}, 0
    for name, a in mat_list:
        off[name] = rows
        rows += _round_up(a.shape[0], 8)
    mats = np.zeros((rows, W), np.float32)
    for name, a in mat_list:
        r = off[name]
        mats[r:r + a.shape[0], :a.shape[1]] = a

    layout = dict(C=C, L=L, D=D, H=H, d_k=d_k, N1=N1, M1=M1, M2=M2,
                  OUT_PAD=OUT_PAD, off=off)
    return jnp.asarray(vecs), jnp.asarray(mats), layout


# ----------------------------------------------------------------------------- params
def _sinusoid_table(n_positions, d_hid, T):
    pos = np.arange(n_positions, dtype=np.float64)[:, None]
    j = np.arange(d_hid)[None, :]
    angle = pos / np.power(T, 2.0 * (j // 2) / d_hid)
    tab = np.zeros((n_positions, d_hid), dtype=np.float64)
    tab[:, 0::2] = np.sin(angle[:, 0::2])
    tab[:, 1::2] = np.cos(angle[:, 1::2])
    return tab.astype(np.float32)


def init_params(key, C, L, D, H, d_k, n_neurons, mlp, T):
    assert n_neurons[0] == D and D % H == 0 and mlp[0] == n_neurons[-1]
    d_h = D // H
    N1 = n_neurons[1]
    M0, M1, M2 = mlp
    keys = jax.random.split(key, 10)

    def nrm(k, shape, scale):
        return jax.random.normal(k, shape, jnp.float32) * jnp.float32(scale)

    p = {}
    p["lni_g"] = jnp.ones((1, C), jnp.float32)
    p["lni_b"] = jnp.zeros((1, C), jnp.float32)
    # inconv Conv1d(C, D, 1) stored transposed (C, D)
    p["cw"] = nrm(keys[0], (C, D), 1.0 / math.sqrt(C))
    p["cb"] = nrm(keys[1], (1, D), 0.02)
    # NOTE: stored (L, D); loading trained PyTorch LayerNorm((d_model, len_max_seq))
    # weights (shape (D, L)) requires a transpose.
    p["lnc_g"] = jnp.ones((L, D), jnp.float32)
    p["lnc_b"] = jnp.zeros((L, D), jnp.float32)
    # positional encoding: len_max_seq+1 positions, d_model//n_head dims, tiled n_head times
    tab = _sinusoid_table(L + 1, d_h, T)
    p["pos"] = jnp.asarray(np.concatenate([tab] * H, axis=1)[1:L + 1], jnp.float32)
    # master query Q ~ N(0, sqrt(2/d_k)) stored dense (H, d_k)
    p["q"] = nrm(keys[2], (H, d_k), math.sqrt(2.0 / d_k))
    # fc1_k: Linear(D, H*d_k)
    p["fkw"] = nrm(keys[3], (D, H * d_k), math.sqrt(2.0 / d_k))
    p["fkb"] = jnp.zeros((1, H * d_k), jnp.float32)
    # LTAE mlp: Linear(D, N1) + BatchNorm1d(N1) (eval stats)
    p["m1w"] = nrm(keys[4], (D, N1), 1.0 / math.sqrt(D))
    p["m1b"] = nrm(keys[5], (1, N1), 0.02)
    p["bn1g"] = jnp.ones((1, N1), jnp.float32); p["bn1b"] = jnp.zeros((1, N1), jnp.float32)
    p["bn1m"] = jnp.zeros((1, N1), jnp.float32); p["bn1v"] = jnp.ones((1, N1), jnp.float32)
    # outlayernorm
    p["olng"] = jnp.ones((1, N1), jnp.float32); p["olnb"] = jnp.zeros((1, N1), jnp.float32)
    # decoder: Linear(M0, M1)+BN+ReLU, Linear(M1, M2)
    p["d1w"] = nrm(keys[6], (M0, M1), 1.0 / math.sqrt(M0))
    p["d1b"] = nrm(keys[7], (1, M1), 0.02)
    p["bn2g"] = jnp.ones((1, M1), jnp.float32); p["bn2b"] = jnp.zeros((1, M1), jnp.float32)
    p["bn2m"] = jnp.zeros((1, M1), jnp.float32); p["bn2v"] = jnp.ones((1, M1), jnp.float32)
    p["d2w"] = nrm(keys[8], (M1, M2), 1.0 / math.sqrt(M1))
    p["d2b"] = nrm(keys[9], (1, M2), 0.02)
    return p


# ----------------------------------------------------------------------------- main
if __name__ == "__main__":
    # Small config consistent with LtaeClassifier(in_channels=C, n_head=H, d_k=8,
    # n_neurons=[32,16], d_model=32, mlp=[16,16,8], len_max_seq=8), eval mode.
    B, L, C = 16, 8, 8         # batch, sequence length (== len_max_seq), input channels
    H, d_k, D = 4, 8, 32       # heads, key dim, d_model
    n_neurons = [32, 16]
    mlp = [16, 16, 8]
    T = 1000

    key = jax.random.PRNGKey(0)
    kx, kp = jax.random.split(key)
    x = jax.random.normal(kx, (B, L, C), jnp.float32)

    params = init_params(kp, C, L, D, H, d_k, n_neurons, mlp, T)
    vecs, mats, layout = pack_params(params, C=C, L=L, D=D, H=H, d_k=d_k,
                                     n_neurons=n_neurons, mlp=mlp)
    forward = make_forward(layout, tb=8)

    out = forward(x, vecs, mats)
    jax.block_until_ready(out)
    assert out.shape == (B, mlp[-1]) and out.dtype == jnp.float32
    print("KERNEL_OK")
</pallas_src>

<mosaic_0001>
module attributes {stable_mosaic.version = 11 : i64} {
  func.func @kernel(%arg0: i32, %arg1: memref<8x8x8xf32, #tpu.memory_space<vmem>>, %arg2: memref<10x128xf32, #tpu.memory_space<vmem>>, %arg3: memref<120x128xf32, #tpu.memory_space<vmem>>, %arg4: memref<8x128xf32, #tpu.memory_space<vmem>>) attributes {dimension_semantics = [#tpu.dimension_semantics<parallel>], iteration_bounds = array<i64: 2>, scalar_prefetch = 0 : i64, scratch_operands = 0 : i64, tpu.core_type = #tpu.core_type<tc>, window_params = [{transform_indices = @transform_0, window_bounds = array<i64: 8, 8, 8>}, {pipeline_mode = #tpu.pipeline_mode<synchronous>, transform_indices = @transform_1, window_bounds = array<i64: 10, 128>}, {pipeline_mode = #tpu.pipeline_mode<synchronous>, transform_indices = @transform_2, window_bounds = array<i64: 120, 128>}, {transform_indices = @transform_3, window_bounds = array<i64: 8, 128>}]} {
    %c0 = arith.constant 0 : index
    %c0_0 = arith.constant 0 : index
    %c0_1 = arith.constant 0 : index
    %0 = vector.load %arg1[%c0, %c0_0, %c0_1] : memref<8x8x8xf32, #tpu.memory_space<vmem>>, vector<8x8x8xf32>
    %cst = arith.constant dense<0.000000e+00> : vector<8x8xf32>
    %1 = vector.multi_reduction <add>, %0, %cst [2] : vector<8x8x8xf32> to vector<8x8xf32>
    %2 = vector.shape_cast %1 : vector<8x8xf32> to vector<8x8x1xf32>
    %cst_2 = arith.constant 8.000000e+00 : f32
    %3 = vector.broadcast %cst_2 : f32 to vector<8x8x1xf32>
    %4 = arith.divf %2, %3 : vector<8x8x1xf32>
    %5 = vector.broadcast %4 : vector<8x8x1xf32> to vector<8x8x8xf32>
    %6 = arith.subf %0, %5 : vector<8x8x8xf32>
    %7 = arith.mulf %6, %6 : vector<8x8x8xf32>
    %cst_3 = arith.constant dense<0.000000e+00> : vector<8x8xf32>
    %8 = vector.multi_reduction <add>, %7, %cst_3 [2] : vector<8x8x8xf32> to vector<8x8xf32>
    %9 = vector.shape_cast %8 : vector<8x8xf32> to vector<8x8x1xf32>
    %cst_4 = arith.constant 8.000000e+00 : f32
    %10 = vector.broadcast %cst_4 : f32 to vector<8x8x1xf32>
    %11 = arith.divf %9, %10 : vector<8x8x1xf32>
    %cst_5 = arith.constant 9.99999974E-6 : f32
    %12 = vector.broadcast %cst_5 : f32 to vector<8x8x1xf32>
    %13 = arith.addf %11, %12 : vector<8x8x1xf32>
    %14 = math.rsqrt %13 : vector<8x8x1xf32>
    %15 = vector.broadcast %14 : vector<8x8x1xf32> to vector<8x8x8xf32>
    %16 = arith.mulf %6, %15 : vector<8x8x8xf32>
    %c0_6 = arith.constant 0 : index
    %c0_7 = arith.constant 0 : index
    %17 = vector.load %arg2[%c0_6, %c0_7] : memref<10x128xf32, #tpu.memory_space<vmem>>, vector<1x8xf32>
    %18 = vector.shape_cast %17 : vector<1x8xf32> to vector<1x1x8xf32>
    %19 = vector.broadcast %18 : vector<1x1x8xf32> to vector<8x8x8xf32>
    %20 = arith.mulf %16, %19 : vector<8x8x8xf32>
    %c1 = arith.constant 1 : index
    %c0_8 = arith.constant 0 : index
    %21 = vector.load %arg2[%c1, %c0_8] : memref<10x128xf32, #tpu.memory_space<vmem>>, vector<1x8xf32>
    %22 = vector.shape_cast %21 : vector<1x8xf32> to vector<1x1x8xf32>
    %23 = vector.broadcast %22 : vector<1x1x8xf32> to vector<8x8x8xf32>
    %24 = arith.addf %20, %23 : vector<8x8x8xf32>
    %25 = vector.shape_cast %24 : vector<8x8x8xf32> to vector<64x8xf32>
    %c0_9 = arith.constant 0 : index
    %c0_10 = arith.constant 0 : index
    %26 = vector.load %arg3[%c0_9, %c0_10] : memref<120x128xf32, #tpu.memory_space<vmem>>, vector<8x32xf32>
    %cst_11 = arith.constant dense<0.000000e+00> : vector<64x32xf32>
    %27 = tpu.matmul %25, %26, %cst_11 {dimension_numbers = #tpu.dot_dimension_numbers<[1], [0], [0], [1], [0, 0, 1, 1], [], []>} : vector<64x8xf32>, vector<8x32xf32>, vector<64x32xf32> -> vector<64x32xf32>
    %c2 = arith.constant 2 : index
    %c0_12 = arith.constant 0 : index
    %28 = vector.load %arg2[%c2, %c0_12] : memref<10x128xf32, #tpu.memory_space<vmem>>, vector<1x32xf32>
    %29 = vector.broadcast %28 : vector<1x32xf32> to vector<64x32xf32>
    %30 = arith.addf %27, %29 : vector<64x32xf32>
    %31 = vector.shape_cast %30 : vector<64x32xf32> to vector<8x8x32xf32>
    %cst_13 = arith.constant dense<0.000000e+00> : vector<8x8xf32>
    %32 = vector.multi_reduction <add>, %31, %cst_13 [2] : vector<8x8x32xf32> to vector<8x8xf32>
    %33 = vector.shape_cast %32 : vector<8x8xf32> to vector<8x8x1xf32>
    %cst_14 = arith.constant 3.200000e+01 : f32
    %34 = vector.broadcast %cst_14 : f32 to vector<8x8x1xf32>
    %35 = arith.divf %33, %34 : vector<8x8x1xf32>
    %cst_15 = arith.constant dense<0.000000e+00> : vector<8x1xf32>
    %36 = vector.multi_reduction <add>, %35, %cst_15 [1] : vector<8x8x1xf32> to vector<8x1xf32>
    %37 = vector.shape_cast %36 : vector<8x1xf32> to vector<8x1x1xf32>
    %cst_16 = arith.constant 8.000000e+00 : f32
    %38 = vector.broadcast %cst_16 : f32 to vector<8x1x1xf32>
    %39 = arith.divf %37, %38 : vector<8x1x1xf32>
    %40 = vector.broadcast %39 : vector<8x1x1xf32> to vector<8x8x32xf32>
    %41 = arith.subf %31, %40 : vector<8x8x32xf32>
    %42 = arith.mulf %41, %41 : vector<8x8x32xf32>
    %cst_17 = arith.constant dense<0.000000e+00> : vector<8x8xf32>
    %43 = vector.multi_reduction <add>, %42, %cst_17 [2] : vector<8x8x32xf32> to vector<8x8xf32>
    %44 = vector.shape_cast %43 : vector<8x8xf32> to vector<8x8x1xf32>
    %cst_18 = arith.constant 3.200000e+01 : f32
    %45 = vector.broadcast %cst_18 : f32 to vector<8x8x1xf32>
    %46 = arith.divf %44, %45 : vector<8x8x1xf32>
    %cst_19 = arith.constant dense<0.000000e+00> : vector<8x1xf32>
    %47 = vector.multi_reduction <add>, %46, %cst_19 [1] : vector<8x8x1xf32> to vector<8x1xf32>
    %48 = vector.shape_cast %47 : vector<8x1xf32> to vector<8x1x1xf32>
    %cst_20 = arith.constant 8.000000e+00 : f32
    %49 = vector.broadcast %cst_20 : f32 to vector<8x1x1xf32>
    %50 = arith.divf %48, %49 : vector<8x1x1xf32>
    %cst_21 = arith.constant 9.99999974E-6 : f32
    %51 = vector.broadcast %cst_21 : f32 to vector<8x1x1xf32>
    %52 = arith.addf %50, %51 : vector<8x1x1xf32>
    %53 = math.rsqrt %52 : vector<8x1x1xf32>
    %54 = vector.broadcast %53 : vector<8x1x1xf32> to vector<8x8x32xf32>
    %55 = arith.mulf %41, %54 : vector<8x8x32xf32>
    %c8 = arith.constant 8 : index
    %c0_22 = arith.constant 0 : index
    %56 = vector.load %arg3[%c8, %c0_22] : memref<120x128xf32, #tpu.memory_space<vmem>>, vector<8x32xf32>
    %57 = vector.shape_cast %56 : vector<8x32xf32> to vector<1x8x32xf32>
    %58 = vector.broadcast %57 : vector<1x8x32xf32> to vector<8x8x32xf32>
    %59 = arith.mulf %55, %58 : vector<8x8x32xf32>
    %c16 = arith.constant 16 : index
    %c0_23 = arith.constant 0 : index
    %60 = vector.load %arg3[%c16, %c0_23] : memref<120x128xf32, #tpu.memory_space<vmem>>, vector<8x32xf32>
    %61 = vector.shape_cast %60 : vector<8x32xf32> to vector<1x8x32xf32>
    %62 = vector.broadcast %61 : vector<1x8x32xf32> to vector<8x8x32xf32>
    %63 = arith.addf %59, %62 : vector<8x8x32xf32>
    %64 = vector.shape_cast %63 : vector<8x8x32xf32> to vector<64x32xf32>
    %c24 = arith.constant 24 : index
    %c0_24 = arith.constant 0 : index
    %65 = vector.load %arg3[%c24, %c0_24] : memref<120x128xf32, #tpu.memory_space<vmem>>, vector<32x32xf32>
    %cst_25 = arith.constant dense<0.000000e+00> : vector<64x32xf32>
    %66 = tpu.matmul %64, %65, %cst_25 {dimension_numbers = #tpu.dot_dimension_numbers<[1], [0], [0], [1], [0, 0, 1, 1], [], []>} : vector<64x32xf32>, vector<32x32xf32>, vector<64x32xf32> -> vector<64x32xf32>
    %c3 = arith.constant 3 : index
    %c0_26 = arith.constant 0 : index
    %67 = vector.load %arg2[%c3, %c0_26] : memref<10x128xf32, #tpu.memory_space<vmem>>, vector<1x32xf32>
    %68 = vector.broadcast %67 : vector<1x32xf32> to vector<64x32xf32>
    %69 = arith.addf %66, %68 : vector<64x32xf32>
    %70 = vector.shape_cast %69 : vector<64x32xf32> to vector<8x8x32xf32>
    %c4 = arith.constant 4 : index
    %c0_27 = arith.constant 0 : index
    %71 = vector.load %arg2[%c4, %c0_27] : memref<10x128xf32, #tpu.memory_space<vmem>>, vector<1x32xf32>
    %72 = vector.shape_cast %71 : vector<1x32xf32> to vector<1x1x32xf32>
    %73 = vector.broadcast %72 : vector<1x1x32xf32> to vector<8x8x32xf32>
    %74 = arith.mulf %70, %73 : vector<8x8x32xf32>
    %75 = vector.extract_strided_slice %74 {offsets = [0, 0, 0], sizes = [8, 8, 8], strides = [1, 1, 1]} : vector<8x8x32xf32> to vector<8x8x8xf32>
    %cst_28 = arith.constant dense<0.000000e+00> : vector<8x8xf32>
    %76 = vector.multi_reduction <add>, %75, %cst_28 [2] : vector<8x8x8xf32> to vector<8x8xf32>
    %77 = vector.shape_cast %76 : vector<8x8xf32> to vector<8x8x1xf32>
    %cst_29 = arith.constant dense<0xFF800000> : vector<8x1xf32>
    %78 = vector.multi_reduction <maximumf>, %77, %cst_29 [1] : vector<8x8x1xf32> to vector<8x1xf32>
    %79 = vector.shape_cast %78 : vector<8x1xf32> to vector<8x1x1xf32>
    %80 = vector.broadcast %79 : vector<8x1x1xf32> to vector<8x8x1xf32>
    %81 = arith.subf %77, %80 : vector<8x8x1xf32>
    %82 = math.exp %81 : vector<8x8x1xf32>
    %cst_30 = arith.constant dense<0.000000e+00> : vector<8x1xf32>
    %83 = vector.multi_reduction <add>, %82, %cst_30 [1] : vector<8x8x1xf32> to vector<8x1xf32>
    %84 = vector.shape_cast %83 : vector<8x1xf32> to vector<8x1x1xf32>
    %85 = vector.broadcast %84 : vector<8x1x1xf32> to vector<8x8x1xf32>
    %86 = arith.divf %82, %85 : vector<8x8x1xf32>
    %87 = vector.extract_strided_slice %63 {offsets = [0, 0, 0], sizes = [8, 8, 8], strides = [1, 1, 1]} : vector<8x8x32xf32> to vector<8x8x8xf32>
    %88 = vector.broadcast %86 : vector<8x8x1xf32> to vector<8x8x8xf32>
    %89 = arith.mulf %88, %87 : vector<8x8x8xf32>
    %cst_31 = arith.constant dense<0.000000e+00> : vector<8x8xf32>
    %90 = vector.multi_reduction <add>, %89, %cst_31 [1] : vector<8x8x8xf32> to vector<8x8xf32>
    %91 = vector.extract_strided_slice %74 {offsets = [0, 0, 8], sizes = [8, 8, 8], strides = [1, 1, 1]} : vector<8x8x32xf32> to vector<8x8x8xf32>
    %cst_32 = arith.constant dense<0.000000e+00> : vector<8x8xf32>
    %92 = vector.multi_reduction <add>, %91, %cst_32 [2] : vector<8x8x8xf32> to vector<8x8xf32>
    %93 = vector.shape_cast %92 : vector<8x8xf32> to vector<8x8x1xf32>
    %cst_33 = arith.constant dense<0xFF800000> : vector<8x1xf32>
    %94 = vector.multi_reduction <maximumf>, %93, %cst_33 [1] : vector<8x8x1xf32> to vector<8x1xf32>
    %95 = vector.shape_cast %94 : vector<8x1xf32> to vector<8x1x1xf32>
    %96 = vector.broadcast %95 : vector<8x1x1xf32> to vector<8x8x1xf32>
    %97 = arith.subf %93, %96 : vector<8x8x1xf32>
    %98 = math.exp %97 : vector<8x8x1xf32>
    %cst_34 = arith.constant dense<0.000000e+00> : vector<8x1xf32>
    %99 = vector.multi_reduction <add>, %98, %cst_34 [1] : vector<8x8x1xf32> to vector<8x1xf32>
    %100 = vector.shape_cast %99 : vector<8x1xf32> to vector<8x1x1xf32>
    %101 = vector.broadcast %100 : vector<8x1x1xf32> to vector<8x8x1xf32>
    %102 = arith.divf %98, %101 : vector<8x8x1xf32>
    %103 = vector.extract_strided_slice %63 {offsets = [0, 0, 8], sizes = [8, 8, 8], strides = [1, 1, 1]} : vector<8x8x32xf32> to vector<8x8x8xf32>
    %104 = vector.broadcast %102 : vector<8x8x1xf32> to vector<8x8x8xf32>
    %105 = arith.mulf %104, %103 : vector<8x8x8xf32>
    %cst_35 = arith.constant dense<0.000000e+00> : vector<8x8xf32>
    %106 = vector.multi_reduction <add>, %105, %cst_35 [1] : vector<8x8x8xf32> to vector<8x8xf32>
    %107 = vector.extract_strided_slice %74 {offsets = [0, 0, 16], sizes = [8, 8, 8], strides = [1, 1, 1]} : vector<8x8x32xf32> to vector<8x8x8xf32>
    %cst_36 = arith.constant dense<0.000000e+00> : vector<8x8xf32>
    %108 = vector.multi_reduction <add>, %107, %cst_36 [2] : vector<8x8x8xf32> to vector<8x8xf32>
    %109 = vector.shape_cast %108 : vector<8x8xf32> to vector<8x8x1xf32>
    %cst_37 = arith.constant dense<0xFF800000> : vector<8x1xf32>
    %110 = vector.multi_reduction <maximumf>, %109, %cst_37 [1] : vector<8x8x1xf32> to vector<8x1xf32>
    %111 = vector.shape_cast %110 : vector<8x1xf32> to vector<8x1x1xf32>
    %112 = vector.broadcast %111 : vector<8x1x1xf32> to vector<8x8x1xf32>
    %113 = arith.subf %109, %112 : vector<8x8x1xf32>
    %114 = math.exp %113 : vector<8x8x1xf32>
    %cst_38 = arith.constant dense<0.000000e+00> : vector<8x1xf32>
    %115 = vector.multi_reduction <add>, %114, %cst_38 [1] : vector<8x8x1xf32> to vector<8x1xf32>
    %116 = vector.shape_cast %115 : vector<8x1xf32> to vector<8x1x1xf32>
    %117 = vector.broadcast %116 : vector<8x1x1xf32> to vector<8x8x1xf32>
    %118 = arith.divf %114, %117 : vector<8x8x1xf32>
    %119 = vector.extract_strided_slice %63 {offsets = [0, 0, 16], sizes = [8, 8, 8], strides = [1, 1, 1]} : vector<8x8x32xf32> to vector<8x8x8xf32>
    %120 = vector.broadcast %118 : vector<8x8x1xf32> to vector<8x8x8xf32>
    %121 = arith.mulf %120, %119 : vector<8x8x8xf32>
    %cst_39 = arith.constant dense<0.000000e+00> : vector<8x8xf32>
    %122 = vector.multi_reduction <add>, %121, %cst_39 [1] : vector<8x8x8xf32> to vector<8x8xf32>
    %123 = vector.extract_strided_slice %74 {offsets = [0, 0, 24], sizes = [8, 8, 8], strides = [1, 1, 1]} : vector<8x8x32xf32> to vector<8x8x8xf32>
    %cst_40 = arith.constant dense<0.000000e+00> : vector<8x8xf32>
    %124 = vector.multi_reduction <add>, %123, %cst_40 [2] : vector<8x8x8xf32> to vector<8x8xf32>
    %125 = vector.shape_cast %124 : vector<8x8xf32> to vector<8x8x1xf32>
    %cst_41 = arith.constant dense<0xFF800000> : vector<8x1xf32>
    %126 = vector.multi_reduction <maximumf>, %125, %cst_41 [1] : vector<8x8x1xf32> to vector<8x1xf32>
    %127 = vector.shape_cast %126 : vector<8x1xf32> to vector<8x1x1xf32>
    %128 = vector.broadcast %127 : vector<8x1x1xf32> to vector<8x8x1xf32>
    %129 = arith.subf %125, %128 : vector<8x8x1xf32>
    %130 = math.exp %129 : vector<8x8x1xf32>
    %cst_42 = arith.constant dense<0.000000e+00> : vector<8x1xf32>
    %131 = vector.multi_reduction <add>, %130, %cst_42 [1] : vector<8x8x1xf32> to vector<8x1xf32>
    %132 = vector.shape_cast %131 : vector<8x1xf32> to vector<8x1x1xf32>
    %133 = vector.broadcast %132 : vector<8x1x1xf32> to vector<8x8x1xf32>
    %134 = arith.divf %130, %133 : vector<8x8x1xf32>
    %135 = vector.extract_strided_slice %63 {offsets = [0, 0, 24], sizes = [8, 8, 8], strides = [1, 1, 1]} : vector<8x8x32xf32> to vector<8x8x8xf32>
    %136 = vector.broadcast %134 : vector<8x8x1xf32> to vector<8x8x8xf32>
    %137 = arith.mulf %136, %135 : vector<8x8x8xf32>
    %cst_43 = arith.constant dense<0.000000e+00> : vector<8x8xf32>
    %138 = vector.multi_reduction <add>, %137, %cst_43 [1] : vector<8x8x8xf32> to vector<8x8xf32>
    %139 = tpu.concatenate %90, %106, %122, %138 in 1 : vector<8x8xf32>, vector<8x8xf32>, vector<8x8xf32>, vector<8x8xf32> -> vector<8x32xf32>
    %c56 = arith.constant 56 : index
    %c0_44 = arith.constant 0 : index
    %140 = vector.load %arg3[%c56, %c0_44] : memref<120x128xf32, #tpu.memory_space<vmem>>, vector<32x16xf32>
    %cst_45 = arith.constant dense<0.000000e+00> : vector<8x16xf32>
    %141 = tpu.matmul %139, %140, %cst_45 {dimension_numbers = #tpu.dot_dimension_numbers<[1], [0], [0], [1], [0, 0, 1, 1], [], []>} : vector<8x32xf32>, vector<32x16xf32>, vector<8x16xf32> -> vector<8x16xf32>
    %c5 = arith.constant 5 : index
    %c0_46 = arith.constant 0 : index
    %142 = vector.load %arg2[%c5, %c0_46] : memref<10x128xf32, #tpu.memory_space<vmem>>, vector<1x16xf32>
    %143 = vector.broadcast %142 : vector<1x16xf32> to vector<8x16xf32>
    %144 = arith.addf %141, %143 : vector<8x16xf32>
    %cst_47 = arith.constant 0.000000e+00 : f32
    %145 = vector.broadcast %cst_47 : f32 to vector<8x16xf32>
    %146 = arith.maximumf %144, %145 : vector<8x16xf32>
    %cst_48 = arith.constant dense<0.000000e+00> : vector<8xf32>
    %147 = vector.multi_reduction <add>, %146, %cst_48 [1] : vector<8x16xf32> to vector<8xf32>
    %148 = vector.shape_cast %147 : vector<8xf32> to vector<8x1xf32>
    %cst_49 = arith.constant 1.600000e+01 : f32
    %149 = vector.broadcast %cst_49 : f32 to vector<8x1xf32>
    %150 = arith.divf %148, %149 : vector<8x1xf32>
    %151 = vector.broadcast %150 : vector<8x1xf32> to vector<8x16xf32>
    %152 = arith.subf %146, %151 : vector<8x16xf32>
    %153 = arith.mulf %152, %152 : vector<8x16xf32>
    %cst_50 = arith.constant dense<0.000000e+00> : vector<8xf32>
    %154 = vector.multi_reduction <add>, %153, %cst_50 [1] : vector<8x16xf32> to vector<8xf32>
    %155 = vector.shape_cast %154 : vector<8xf32> to vector<8x1xf32>
    %cst_51 = arith.constant 1.600000e+01 : f32
    %156 = vector.broadcast %cst_51 : f32 to vector<8x1xf32>
    %157 = arith.divf %155, %156 : vector<8x1xf32>
    %cst_52 = arith.constant 9.99999974E-6 : f32
    %158 = vector.broadcast %cst_52 : f32 to vector<8x1xf32>
    %159 = arith.addf %157, %158 : vector<8x1xf32>
    %160 = math.rsqrt %159 : vector<8x1xf32>
    %161 = vector.broadcast %160 : vector<8x1xf32> to vector<8x16xf32>
    %162 = arith.mulf %152, %161 : vector<8x16xf32>
    %c6 = arith.constant 6 : index
    %c0_53 = arith.constant 0 : index
    %163 = vector.load %arg2[%c6, %c0_53] : memref<10x128xf32, #tpu.memory_space<vmem>>, vector<1x16xf32>
    %164 = vector.broadcast %163 : vector<1x16xf32> to vector<8x16xf32>
    %165 = arith.mulf %162, %164 : vector<8x16xf32>
    %c7 = arith.constant 7 : index
    %c0_54 = arith.constant 0 : index
    %166 = vector.load %arg2[%c7, %c0_54] : memref<10x128xf32, #tpu.memory_space<vmem>>, vector<1x16xf32>
    %167 = vector.broadcast %166 : vector<1x16xf32> to vector<8x16xf32>
    %168 = arith.addf %165, %167 : vector<8x16xf32>
    %c88 = arith.constant 88 : index
    %c0_55 = arith.constant 0 : index
    %169 = vector.load %arg3[%c88, %c0_55] : memref<120x128xf32, #tpu.memory_space<vmem>>, vector<16x16xf32>
    %cst_56 = arith.constant dense<0.000000e+00> : vector<8x16xf32>
    %170 = tpu.matmul %168, %169, %cst_56 {dimension_numbers = #tpu.dot_dimension_numbers<[1], [0], [0], [1], [0, 0, 1, 1], [], []>} : vector<8x16xf32>, vector<16x16xf32>, vector<8x16xf32> -> vector<8x16xf32>
    %c8_57 = arith.constant 8 : index
    %c0_58 = arith.constant 0 : index
    %171 = vector.load %arg2[%c8_57, %c0_58] : memref<10x128xf32, #tpu.memory_space<vmem>>, vector<1x16xf32>
    %172 = vector.broadcast %171 : vector<1x16xf32> to vector<8x16xf32>
    %173 = arith.addf %170, %172 : vector<8x16xf32>
    %cst_59 = arith.constant 0.000000e+00 : f32
    %174 = vector.broadcast %cst_59 : f32 to vector<8x16xf32>
    %175 = arith.maximumf %173, %174 : vector<8x16xf32>
    %c104 = arith.constant 104 : index
    %c0_60 = arith.constant 0 : index
    %176 = vector.load %arg3[%c104, %c0_60] : memref<120x128xf32, #tpu.memory_space<vmem>>, vector<16x128xf32>
    %cst_61 = arith.constant dense<0.000000e+00> : vector<8x128xf32>
    %177 = tpu.matmul %175, %176, %cst_61 {dimension_numbers = #tpu.dot_dimension_numbers<[1], [0], [0], [1], [0, 0, 1, 1], [], []>} : vector<8x16xf32>, vector<16x128xf32>, vector<8x128xf32> -> vector<8x128xf32>
    %c9 = arith.constant 9 : index
    %c0_62 = arith.constant 0 : index
    %178 = vector.load %arg2[%c9, %c0_62] : memref<10x128xf32, #tpu.memory_space<vmem>>, vector<1x128xf32>
    %179 = vector.broadcast %178 : vector<1x128xf32> to vector<8x128xf32>
    %180 = arith.addf %177, %179 : vector<8x128xf32>
    %c0_63 = arith.constant 0 : index
    %c0_64 = arith.constant 0 : index
    %181 = vector.load %arg4[%c0_63, %c0_64] : memref<8x128xf32, #tpu.memory_space<vmem>>, vector<8x128xf32>
    tpu.vector_store %arg4[%c0_63, %c0_64], %180 {strides = array<i32>} : memref<8x128xf32, #tpu.memory_space<vmem>>, vector<8x128xf32>,
    return
  }
  func.func @transform_0(%arg0: i32) -> (i32, i32, i32) {
    %c0_i32 = arith.constant 0 : i32
    %c0_i32_0 = arith.constant 0 : i32
    %c0_i32_1 = arith.constant 0 : i32
    return %arg0, %c0_i32, %c0_i32_0 : i32, i32, i32
  }
  func.func @transform_1(%arg0: i32) -> (i32, i32) {
    %c0_i32 = arith.constant 0 : i32
    %c0_i32_0 = arith.constant 0 : i32
    %c0_i32_1 = arith.constant 0 : i32
    return %c0_i32, %c0_i32_0 : i32, i32
  }
  func.func @transform_2(%arg0: i32) -> (i32, i32) {
    %c0_i32 = arith.constant 0 : i32
    %c0_i32_0 = arith.constant 0 : i32
    %c0_i32_1 = arith.constant 0 : i32
    return %c0_i32, %c0_i32_0 : i32, i32
  }
  func.func @transform_3(%arg0: i32) -> (i32, i32) {
    %c0_i32 = arith.constant 0 : i32
    %c0_i32_0 = arith.constant 0 : i32
    return %arg0, %c0_i32 : i32, i32
  }
}

</mosaic_0001>

<llo_original>
// kernel: forward.1
$region0: #{forward.1}
  #allocation0 [shape = 'u32[]', space=smem, size = 0x4, offset = 0x4, fixed_abs, tag = 'smem constant byte address 0x4 - core index']
  #allocation1 [shape = 'u32[144,128]{1,0:T(1,128)}', space=vmem, size = 0x12000, scoped, tag = 'internal scratch']
  %s0 = inlined_call_operand.vmem [shape: f32[16,8,8], index: 0, kind: input, shape index: {}]
  %s1 = inlined_call_operand.vmem [shape: f32[10,128], index: 1, kind: input, shape index: {}]
  %s2 = inlined_call_operand.vmem [shape: f32[120,128], index: 2, kind: input, shape index: {}]
  %s3 = inlined_call_operand.vmem [shape: f32[16,128], index: 3, kind: output, shape index: {}]
  %s4 = sld [smem:[#allocation0]]
  $region45: #{forward.1} parent=0
    _
  %s6 = ssub.s32 1, %s4
  %s7 = scalar_select 0, %s6, %s4
  loop: start=0, step=1, limit=4
  $region2: #{forward.1} parent=0 // loop_pre_header
    _
  $region3: #{forward.1} parent=0 // loop_header
    %s9 = sphi 0, %s13
    %p10 = scmp.ge.s32.totalorder %s9, 4
    %s19 = sphi 0, %s21
    %s22 = sphi 0, %s19
    %s23 = sphi 0, %s22
    %s39 = sphi 0, %s23
    %s43 = sphi 0, %s43
    %s45 = sphi 0, %s43
    %s46 = sphi 0, %s45
    %s60 = sphi 0, %s46
    %s64 = sphi 0, %s64
    %s66 = sphi 0, %s64
    %s67 = sphi 0, %s66
    %s81 = sphi 0, %s67
    %s87 = sphi 0, %s89
    %s90 = sphi 0, %s87
    %s91 = sphi 0, %s90
    %s107 = sphi 0, %s91
  $region4: #{forward.1} parent=0 // loop_header_branch
    %12 = sbr.rel (%p10) target = $region8
  $region5: #{forward.1} parent=0 // loop_body
    %s14 = ssub.s32 %s9, 1
    %s15 = ssub.s32 %s9, 2
    %s16 = sadd.s32 %s9, 1
    %s17 = ssub.s32 %s9, %s16
    %p18 = scmp.eq.s32.totalorder %s17, 0
    %s20 = sadd.s32 %s19, 1
    %s21 = scalar_select %p18, %s19, %s20
    %p24 = pneg %p18
    %p25 = scmp.eq.s32.totalorder %s9, 1
    %p26 = por %p24, %p25
    %p27 = scmp.ne.s32.totalorder %s19, %s22
    %p28 = scmp.eq.s32.totalorder %s9, 0
    %p29 = por %p27, %p28
    %p30 = scmp.ne.s32.totalorder %s19, %s22
    %p31 = scmp.eq.s32.totalorder %s14, 1
    %p32 = por %p30, %p31
    %p33 = scmp.ne.s32.totalorder %s22, %s23
    %p34 = scmp.eq.s32.totalorder %s14, 0
    %p35 = por %p33, %p34
    %p36 = scmp.ne.s32.totalorder %s22, %s23
    %p37 = scmp.eq.s32.totalorder %s15, 1
    %p38 = por %p36, %p37
    %p40 = scmp.ne.s32.totalorder %s23, %s39
    %p41 = scmp.eq.s32.totalorder %s15, 0
    %p42 = por %p40, %p41
    %s44 = sadd.s32 %s43, 1
    %p47 = scmp.eq.s32.totalorder %s9, 1
    %p48 = scmp.ne.s32.totalorder %s43, %s45
    %p49 = scmp.eq.s32.totalorder %s9, 0
    %p50 = por %p48, %p49
    %p51 = scmp.ne.s32.totalorder %s43, %s45
    %p52 = scmp.eq.s32.totalorder %s14, 1
    %p53 = por %p51, %p52
    %p54 = scmp.ne.s32.totalorder %s45, %s46
    %p55 = scmp.eq.s32.totalorder %s14, 0
    %p56 = por %p54, %p55
    %p57 = scmp.ne.s32.totalorder %s45, %s46
    %p58 = scmp.eq.s32.totalorder %s15, 1
    %p59 = por %p57, %p58
    %p61 = scmp.ne.s32.totalorder %s46, %s60
    %p62 = scmp.eq.s32.totalorder %s15, 0
    %p63 = por %p61, %p62
    %s65 = sadd.s32 %s64, 1
    %p68 = scmp.eq.s32.totalorder %s9, 1
    %p69 = scmp.ne.s32.totalorder %s64, %s66
    %p70 = scmp.eq.s32.totalorder %s9, 0
    %p71 = por %p69, %p70
    %p72 = scmp.ne.s32.totalorder %s64, %s66
    %p73 = scmp.eq.s32.totalorder %s14, 1
    %p74 = por %p72, %p73
    %p75 = scmp.ne.s32.totalorder %s66, %s67
    %p76 = scmp.eq.s32.totalorder %s14, 0
    %p77 = por %p75, %p76
    %p78 = scmp.ne.s32.totalorder %s66, %s67
    %p79 = scmp.eq.s32.totalorder %s15, 1
    %p80 = por %p78, %p79
    %p82 = scmp.ne.s32.totalorder %s67, %s81
    %p83 = scmp.eq.s32.totalorder %s15, 0
    %p84 = por %p82, %p83
    %s85 = ssub.s32 %s9, %s16
    %p86 = scmp.eq.s32.totalorder %s85, 0
    %s88 = sadd.s32 %s87, 1
    %s89 = scalar_select %p86, %s87, %s88
    %p92 = pneg %p86
    %p93 = scmp.eq.s32.totalorder %s9, 1
    %p94 = por %p92, %p93
    %p95 = scmp.ne.s32.totalorder %s87, %s90
    %p96 = scmp.eq.s32.totalorder %s9, 0
    %p97 = por %p95, %p96
    %p98 = scmp.ne.s32.totalorder %s87, %s90
    %p99 = scmp.eq.s32.totalorder %s14, 1
    %p100 = por %p98, %p99
    %p101 = scmp.ne.s32.totalorder %s90, %s91
    %p102 = scmp.eq.s32.totalorder %s14, 0
    %p103 = por %p101, %p102
    %p104 = scmp.ne.s32.totalorder %s90, %s91
    %p105 = scmp.eq.s32.totalorder %s15, 1
    %p106 = por %p104, %p105
    %p108 = scmp.ne.s32.totalorder %s91, %s107
    %p109 = scmp.eq.s32.totalorder %s15, 0
    %p110 = por %p108, %p109
    %p111 = scmp.le.s32.totalorder 1, %s9
    %p112 = scmp.lt.s32.totalorder %s9, 3
    %p113 = pnand %p111, %p112
    %p114 = pneg %p113
    // Predicated region
    $region9: #{forward.1} parent=5 // pred_check
      _
    $region10: #{forward.1} parent=5 // pred_check_branch
      %116 = sbr.rel (%p113) target = $region12
    $region11: #{forward.1} parent=5 // pred_region
      %s117 = ssub.s32 %s9, 1
      // Predicated region
      $region13: #{forward.1} parent=11 // pred_check
        %p118 = pneg %p56
      $region14: #{forward.1} parent=11 // pred_check_branch
        %120 = sbr.rel (%p118) target = $region16
      $region15: #{forward.1} parent=11 // pred_region
        _
      $region16: #{forward.1} parent=11 // pred_fallthru
        _
      // Predicated region
      $region17: #{forward.1} parent=11 // pred_check
        %p121 = pneg %p77
      $region18: #{forward.1} parent=11 // pred_check_branch
        %123 = sbr.rel (%p121) target = $region20
      $region19: #{forward.1} parent=11 // pred_region
        _
      $region20: #{forward.1} parent=11 // pred_fallthru
        _
    $region12: #{forward.1} parent=5 // pred_fallthru
      _
    %p124 = scmp.lt.s32.totalorder %s9, 2
    // Predicated region
    $region21: #{forward.1} parent=5 // pred_check
      %p125 = pneg %p124
    $region22: #{forward.1} parent=5 // pred_check_branch
      %127 = sbr.rel (%p125) target = $region24
    $region23: #{forward.1} parent=5 // pred_region
      // Predicated region
      $region25: #{forward.1} parent=23 // pred_check
        %p128 = pneg %p29
      $region26: #{forward.1} parent=23 // pred_check_branch
        %130 = sbr.rel (%p128) target = $region28
      $region27: #{forward.1} parent=23 // pred_region
        %s131 = smul.u32 8, %s9
        %p132 = scmp.lt.s32.totalorder %s131, 15
        %s133 = scalar_select %p132, %s131, 15
        %s134 = smul.addr %s133, 8
        %s135 = scalar_lea.vmem %s0, %s134
        %s136 = smul.u32 8, %s9
      $region28: #{forward.1} parent=23 // pred_fallthru
        _
    $region24: #{forward.1} parent=5 // pred_fallthru
      _
    %p137 = scmp.le.s32.totalorder 1, %s9
    %p138 = scmp.lt.s32.totalorder %s9, 3
    %p139 = pnand %p137, %p138
    %p140 = pneg %p139
    // Predicated region
    $region29: #{forward.1} parent=5 // pred_check
      _
    $region30: #{forward.1} parent=5 // pred_check_branch
      %142 = sbr.rel (%p139) target = $region32
    $region31: #{forward.1} parent=5 // pred_region
      %s143 = ssub.s32 %s9, 1
      %s144 = smul.u32 8, %s14
      %p145 = scmp.lt.s32.totalorder %s144, 15
      %s146 = scalar_select %p145, %s144, 15
      %s147 = smul.addr %s146, 8
      %s148 = scalar_lea.vmem %s0, %s147
      %p149 = pneg %p35
      %p150 = pneg %p32
      %p151 = pneg %p56
      %p152 = pneg %p53
      %p153 = pneg %p77
      %p154 = pneg %p74
      %p155 = pneg %p103
      %p156 = pneg %p100
      %p157 = scmp.lt.s32.totalorder %s14, 1
      %s158 = scalar_select %p157, %s14, 1
      %s159 = smul.addr %s158, 8
      %s160 = scalar_lea.vmem %s3, %s159
      %s161 = smul.u32 8, %s14
      %p162 = scmp.lt.s32.totalorder %s161, 15
      %s163 = scalar_select %p162, %s161, 15
      %s164 = smul.addr %s163, 8
      %s165 = scalar_lea.vmem %s0, %s164
      %s166 = smul.u32 8, %s14
      %p167 = scmp.lt.s32.totalorder %s14, 1
      %s168 = scalar_select %p167, %s14, 1
      %s169 = smul.addr %s168, 8
      %s170 = scalar_lea.vmem %s3, %s169
      %v171 = vld [vmem:[%s165] sm:$0xff]
      %v172 = vld [vmem:[%s165 + $0x8] sm:$0xff]
      %v173 = vld [vmem:[%s165 + $0x10] sm:$0xff]
      %v174 = vld [vmem:[%s165 + $0x18] sm:$0xff]
      %v175 = vld [vmem:[%s165 + $0x20] sm:$0xff]
      %v176 = vld [vmem:[%s165 + $0x28] sm:$0xff]
      %v177 = vld [vmem:[%s165 + $0x30] sm:$0xff]
      %v178 = vld [vmem:[%s165 + $0x38] sm:$0xff]
      %vm179 = vcmask 64512
      %v180 = vsel %vm179, %v171, 0.0
      %181 = vadd.xlane.f32.xlu0 %v180
      %v182 = vpop.xlane.xlu0 %181
      %v183 = vsel %vm179, %v172, 0.0
      %184 = vadd.xlane.f32.xlu0 %v183
      %v185 = vpop.xlane.xlu0 %184
      %v186 = vsel %vm179, %v173, 0.0
      %187 = vadd.xlane.f32.xlu0 %v186
      %v188 = vpop.xlane.xlu0 %187
      %v189 = vsel %vm179, %v174, 0.0
      %190 = vadd.xlane.f32.xlu0 %v189
      %v191 = vpop.xlane.xlu0 %190
      %v192 = vsel %vm179, %v175, 0.0
      %193 = vadd.xlane.f32.xlu0 %v192
      %v194 = vpop.xlane.xlu0 %193
      %v195 = vsel %vm179, %v176, 0.0
      %196 = vadd.xlane.f32.xlu0 %v195
      %v197 = vpop.xlane.xlu0 %196
      %v198 = vsel %vm179, %v177, 0.0
      %199 = vadd.xlane.f32.xlu0 %v198
      %v200 = vpop.xlane.xlu0 %199
      %v201 = vsel %vm179, %v178, 0.0
      %202 = vadd.xlane.f32.xlu0 %v201
      %v203 = vpop.xlane.xlu0 %202
      %v204 = vrcp.pop 8.0
      %v205 = vmul.f32 %v182, %v204
      %v206 = vmul.f32 %v185, %v204
      %v207 = vmul.f32 %v188, %v204
      %v208 = vmul.f32 %v191, %v204
      %v209 = vmul.f32 %v194, %v204
      %v210 = vmul.f32 %v197, %v204
      %v211 = vmul.f32 %v200, %v204
      %v212 = vmul.f32 %v203, %v204
      %v213 = vsub.f32 %v171, %v205
      %v214 = vsub.f32 %v172, %v206
      %v215 = vsub.f32 %v173, %v207
      %v216 = vsub.f32 %v174, %v208
      %v217 = vsub.f32 %v175, %v209
      %v218 = vsub.f32 %v176, %v210
      %v219 = vsub.f32 %v177, %v211
      %v220 = vsub.f32 %v178, %v212
      %v221 = vmul.f32 %v213, %v213
      %v222 = vmul.f32 %v214, %v214
      %v223 = vmul.f32 %v215, %v215
      %v224 = vmul.f32 %v216, %v216
      %v225 = vmul.f32 %v217, %v217
      %v226 = vmul.f32 %v218, %v218
      %v227 = vmul.f32 %v219, %v219
      %v228 = vmul.f32 %v220, %v220
      %v229 = vsel %vm179, %v221, 0.0
      %230 = vadd.xlane.f32.xlu0 %v229
      %v231 = vpop.xlane.xlu0 %230
      %v232 = vsel %vm179, %v222, 0.0
      %233 = vadd.xlane.f32.xlu0 %v232
      %v234 = vpop.xlane.xlu0 %233
      %v235 = vsel %vm179, %v223, 0.0
      %236 = vadd.xlane.f32.xlu0 %v235
      %v237 = vpop.xlane.xlu0 %236
      %v238 = vsel %vm179, %v224, 0.0
      %239 = vadd.xlane.f32.xlu0 %v238
      %v240 = vpop.xlane.xlu0 %239
      %v241 = vsel %vm179, %v225, 0.0
      %242 = vadd.xlane.f32.xlu0 %v241
      %v243 = vpop.xlane.xlu0 %242
      %v244 = vsel %vm179, %v226, 0.0
      %245 = vadd.xlane.f32.xlu0 %v244
      %v246 = vpop.xlane.xlu0 %245
      %v247 = vsel %vm179, %v227, 0.0
      %248 = vadd.xlane.f32.xlu0 %v247
      %v249 = vpop.xlane.xlu0 %248
      %v250 = vsel %vm179, %v228, 0.0
      %251 = vadd.xlane.f32.xlu0 %v250
      %v252 = vpop.xlane.xlu0 %251
      %v253 = vmul.f32 %v231, %v204
      %v254 = vmul.f32 %v234, %v204
      %v255 = vmul.f32 %v237, %v204
      %v256 = vmul.f32 %v240, %v204
      %v257 = vmul.f32 %v243, %v204
      %v258 = vmul.f32 %v246, %v204
      %v259 = vmul.f32 %v249, %v204
      %v260 = vmul.f32 %v252, %v204
      %v261 = vadd.f32 %v253, 1e-05
      %v262 = vadd.f32 %v254, 1e-05
      %v263 = vadd.f32 %v255, 1e-05
      %v264 = vadd.f32 %v256, 1e-05
      %v265 = vadd.f32 %v257, 1e-05
      %v266 = vadd.f32 %v258, 1e-05
      %v267 = vadd.f32 %v259, 1e-05
      %v268 = vadd.f32 %v260, 1e-05
      %v269 = vrsqrt.pop %v261
      %v270 = vrsqrt.pop %v262
      %v271 = vrsqrt.pop %v263
      %v272 = vrsqrt.pop %v264
      %v273 = vrsqrt.pop %v265
      %v274 = vrsqrt.pop %v266
      %v275 = vrsqrt.pop %v267
      %v276 = vrsqrt.pop %v268
      %v277 = vmul.f32 %v213, %v269
      %v278 = vmul.f32 %v214, %v270
      %v279 = vmul.f32 %v215, %v271
      %v280 = vmul.f32 %v216, %v272
      %v281 = vmul.f32 %v217, %v273
      %v282 = vmul.f32 %v218, %v274
      %v283 = vmul.f32 %v219, %v275
      %v284 = vmul.f32 %v220, %v276
      %v285 = vld [vmem:[%s1] sm:$0x1]
      %v286 = vlaneseq
      %v287 = vshrl.u32 %v286, 7
      %v288 = vsub.s32 0, %v287
      %v289 = vrot.slane %v285, %v288
      %v290 = vmul.f32 %v277, %v289
      %v291 = vmul.f32 %v278, %v289
      %v292 = vmul.f32 %v279, %v289
      %v293 = vmul.f32 %v280, %v289
      %v294 = vmul.f32 %v281, %v289
      %v295 = vmul.f32 %v282, %v289
      %v296 = vmul.f32 %v283, %v289
      %v297 = vmul.f32 %v284, %v289
      %v298 = vld [vmem:[%s1 + $0x1] sm:$0x1]
      %v299 = vlaneseq
      %v300 = vshrl.u32 %v299, 7
      %v301 = vsub.s32 0, %v300
      %v302 = vrot.slane %v298, %v301
      %v303 = vadd.f32 %v290, %v302
      %v304 = vadd.f32 %v291, %v302
      %v305 = vadd.f32 %v292, %v302
      %v306 = vadd.f32 %v293, %v302
      %v307 = vadd.f32 %v294, %v302
      %v308 = vadd.f32 %v295, %v302
      %v309 = vadd.f32 %v296, %v302
      %v310 = vadd.f32 %v297, %v302
      %v311 = vld [vmem:[%s2] sm:$0xff]
      %v312 = vld [vmem:[%s1 + $0x2] sm:$0x1]
      %v313 = vlaneseq
      %v314 = vshrl.u32 %v313, 7
      %v315 = vsub.s32 0, %v314
      %v316 = vrot.slane %v312, %v315
      %v318 = vsel %vm179, %v303, 0
      %v321 = vsel %vm179, %v304, 0
      %v324 = vsel %vm179, %v305, 0
      %v327 = vsel %vm179, %v306, 0
      %v330 = vsel %vm179, %v307, 0
      %v333 = vsel %vm179, %v308, 0
      %v336 = vsel %vm179, %v309, 0
      %v339 = vsel %vm179, %v310, 0
      %341 = vmatprep.subr.mxu0 0.0
      %342 = vmatpush1.msra.mxu0 %v311
      %343 = vmatprep.subr.mxu0 0.0
      %344 = vmatpush1.msra.mxu0 0.0
      %345 = vmatprep.subr.mxu0 0.0
      %346 = vmatpush1.msra.mxu0 0.0
      %347 = vmatprep.subr.mxu0 0.0
      %348 = vmatpush1.msra.mxu0 0.0
      %349 = vmatprep.subr.mxu0 0.0
      %350 = vmatpush1.msra.mxu0 0.0
      %351 = vmatprep.subr.mxu0 0.0
      %352 = vmatpush1.msra.mxu0 0.0
      %353 = vmatprep.subr.mxu0 0.0
      %354 = vmatpush1.msra.mxu0 0.0
      %355 = vmatprep.subr.mxu0 0.0
      %356 = vmatpush1.msra.mxu0 0.0
      %357 = vmatprep.subr.mxu0 0.0
      %358 = vmatpush1.msra.mxu0 0.0
      %359 = vmatprep.subr.mxu0 0.0
      %360 = vmatpush1.msra.mxu0 0.0
      %361 = vmatprep.subr.mxu0 0.0
      %362 = vmatpush1.msra.mxu0 0.0
      %363 = vmatprep.subr.mxu0 0.0
      %364 = vmatpush1.msra.mxu0 0.0
      %365 = vmatprep.subr.mxu0 0.0
      %366 = vmatpush1.msra.mxu0 0.0
      %367 = vmatprep.subr.mxu0 0.0
      %368 = vmatpush1.msra.mxu0 0.0
      %369 = vmatprep.subr.mxu0 0.0
      %370 = vmatpush1.msra.mxu0 0.0
      %371 = vmatprep.subr.mxu0 0.0
      %372 = vmatpush1.msra.mxu0 0.0
      %373 = vmatprep.subr.mxu0 0.0
      %374 = vmatpush1.msra.mxu0 0.0
      %375 = vmatprep.subr.mxu0 0.0
      %376 = vmatpush1.msra.mxu0 0.0
      %377 = vmatprep.subr.mxu0 0.0
      %378 = vmatpush1.msra.mxu0 0.0
      %379 = vmatprep.subr.mxu0 0.0
      %380 = vmatpush1.msra.mxu0 0.0
      %381 = vmatprep.subr.mxu0 0.0
      %382 = vmatpush1.msra.mxu0 0.0
      %383 = vmatprep.subr.mxu0 0.0
      %384 = vmatpush1.msra.mxu0 0.0
      %385 = vmatprep.subr.mxu0 0.0
      %386 = vmatpush1.msra.mxu0 0.0
      %387 = vmatprep.subr.mxu0 0.0
      %388 = vmatpush1.msra.mxu0 0.0
      %389 = vmatprep.subr.mxu0 0.0
      %390 = vmatpush1.msra.mxu0 0.0
      %391 = vmatprep.subr.mxu0 0.0
      %392 = vmatpush1.msra.mxu0 0.0
      %393 = vmatprep.subr.mxu0 0.0
      %394 = vmatpush1.msra.mxu0 0.0
      %395 = vmatprep.subr.mxu0 0.0
      %396 = vmatpush1.msra.mxu0 0.0
      %397 = vmatprep.subr.mxu0 0.0
      %398 = vmatpush1.msra.mxu0 0.0
      %399 = vmatprep.subr.mxu0 0.0
      %400 = vmatpush1.msra.mxu0 0.0
      %401 = vmatprep.subr.mxu0 0.0
      %402 = vmatpush1.msra.mxu0 0.0
      %403 = vmatprep.subr.mxu0 0.0
      %404 = vmatpush1.msra.mxu0 0.0
      %405 = vmatprep.mubr.f32.mxu0 0.0
      %406 = vmatmul.mubr.f32.gmra.mrb[0].mxu0 %v318
      %v407 = vpop.f32.mrb[0].mxu0
      %v408 = vadd.f32 %v316, %v407
      %v409 = vpop.f32.mrb[0].mxu0
      %410 = vmatprep.mubr.f32.mxu0 0.0
      %411 = vmatmul.mubr.f32.gmra.mrb[0].mxu0 %v321
      %v412 = vpop.f32.mrb[0].mxu0
      %v413 = vadd.f32 %v316, %v412
      %v414 = vpop.f32.mrb[0].mxu0
      %415 = vmatprep.mubr.f32.mxu0 0.0
      %416 = vmatmul.mubr.f32.gmra.mrb[0].mxu0 %v324
      %v417 = vpop.f32.mrb[0].mxu0
      %v418 = vadd.f32 %v316, %v417
      %v419 = vpop.f32.mrb[0].mxu0
      %420 = vmatprep.mubr.f32.mxu0 0.0
      %421 = vmatmul.mubr.f32.gmra.mrb[0].mxu0 %v327
      %v422 = vpop.f32.mrb[0].mxu0
      %v423 = vadd.f32 %v316, %v422
      %v424 = vpop.f32.mrb[0].mxu0
      %425 = vmatprep.mubr.f32.mxu0 0.0
      %426 = vmatmul.mubr.f32.gmra.mrb[0].mxu0 %v330
      %v427 = vpop.f32.mrb[0].mxu0
      %v428 = vadd.f32 %v316, %v427
      %v429 = vpop.f32.mrb[0].mxu0
      %430 = vmatprep.mubr.f32.mxu0 0.0
      %431 = vmatmul.mubr.f32.gmra.mrb[0].mxu0 %v333
      %v432 = vpop.f32.mrb[0].mxu0
      %v433 = vadd.f32 %v316, %v432
      %v434 = vpop.f32.mrb[0].mxu0
      %435 = vmatprep.mubr.f32.mxu0 0.0
      %436 = vmatmul.mubr.f32.gmra.mrb[0].mxu0 %v336
      %v437 = vpop.f32.mrb[0].mxu0
      %v438 = vadd.f32 %v316, %v437
      %v439 = vpop.f32.mrb[0].mxu0
      %440 = vmatprep.mubr.f32.mxu0 0.0
      %441 = vmatmul.mubr.f32.gmra.mrb[0].mxu0 %v339
      %v442 = vpop.f32.mrb[0].mxu0
      %v443 = vadd.f32 %v316, %v442
      %v444 = vpop.f32.mrb[0].mxu0
      %445 = vdwg.mxu0
      %vm446 = vcmask 261120
      %v447 = vsel %vm446, %v408, 0.0
      %448 = vadd.xlane.f32.xlu0 %v447
      %v449 = vpop.xlane.xlu0 %448
      %v450 = vsel %vm446, %v413, 0.0
      %451 = vadd.xlane.f32.xlu0 %v450
      %v452 = vpop.xlane.xlu0 %451
      %v453 = vsel %vm446, %v418, 0.0
      %454 = vadd.xlane.f32.xlu0 %v453
      %v455 = vpop.xlane.xlu0 %454
      %v456 = vsel %vm446, %v423, 0.0
      %457 = vadd.xlane.f32.xlu0 %v456
      %v458 = vpop.xlane.xlu0 %457
      %v459 = vsel %vm446, %v428, 0.0
      %460 = vadd.xlane.f32.xlu0 %v459
      %v461 = vpop.xlane.xlu0 %460
      %v462 = vsel %vm446, %v433, 0.0
      %463 = vadd.xlane.f32.xlu0 %v462
      %v464 = vpop.xlane.xlu0 %463
      %v465 = vsel %vm446, %v438, 0.0
      %466 = vadd.xlane.f32.xlu0 %v465
      %v467 = vpop.xlane.xlu0 %466
      %v468 = vsel %vm446, %v443, 0.0
      %469 = vadd.xlane.f32.xlu0 %v468
      %v470 = vpop.xlane.xlu0 %469
      %v471 = vrcp.pop 32.0
      %v472 = vmul.f32 %v449, %v471
      %v473 = vmul.f32 %v452, %v471
      %v474 = vmul.f32 %v455, %v471
      %v475 = vmul.f32 %v458, %v471
      %v476 = vmul.f32 %v461, %v471
      %v477 = vmul.f32 %v464, %v471
      %v478 = vmul.f32 %v467, %v471
      %v479 = vmul.f32 %v470, %v471
      %v480 = vrot.slane %v472, 4
      %v481 = vadd.f32 %v472, %v480
      %v482 = vrot.slane %v481, 2
      %v483 = vadd.f32 %v481, %v482
      %v484 = vrot.slane %v483, 1
      %v485 = vadd.f32 %v483, %v484
      %v486 = vrot.slane %v473, 4
      %v487 = vadd.f32 %v473, %v486
      %v488 = vrot.slane %v487, 2
      %v489 = vadd.f32 %v487, %v488
      %v490 = vrot.slane %v489, 1
      %v491 = vadd.f32 %v489, %v490
      %v492 = vrot.slane %v474, 4
      %v493 = vadd.f32 %v474, %v492
      %v494 = vrot.slane %v493, 2
      %v495 = vadd.f32 %v493, %v494
      %v496 = vrot.slane %v495, 1
      %v497 = vadd.f32 %v495, %v496
      %v498 = vrot.slane %v475, 4
      %v499 = vadd.f32 %v475, %v498
      %v500 = vrot.slane %v499, 2
      %v501 = vadd.f32 %v499, %v500
      %v502 = vrot.slane %v501, 1
      %v503 = vadd.f32 %v501, %v502
      %v504 = vrot.slane %v476, 4
      %v505 = vadd.f32 %v476, %v504
      %v506 = vrot.slane %v505, 2
      %v507 = vadd.f32 %v505, %v506
      %v508 = vrot.slane %v507, 1
      %v509 = vadd.f32 %v507, %v508
      %v510 = vrot.slane %v477, 4
      %v511 = vadd.f32 %v477, %v510
      %v512 = vrot.slane %v511, 2
      %v513 = vadd.f32 %v511, %v512
      %v514 = vrot.slane %v513, 1
      %v515 = vadd.f32 %v513, %v514
      %v516 = vrot.slane %v478, 4
      %v517 = vadd.f32 %v478, %v516
      %v518 = vrot.slane %v517, 2
      %v519 = vadd.f32 %v517, %v518
      %v520 = vrot.slane %v519, 1
      %v521 = vadd.f32 %v519, %v520
      %v522 = vrot.slane %v479, 4
      %v523 = vadd.f32 %v479, %v522
      %v524 = vrot.slane %v523, 2
      %v525 = vadd.f32 %v523, %v524
      %v526 = vrot.slane %v525, 1
      %v527 = vadd.f32 %v525, %v526
      %v528 = vmul.f32 %v485, %v204
      %v529 = vmul.f32 %v491, %v204
      %v530 = vmul.f32 %v497, %v204
      %v531 = vmul.f32 %v503, %v204
      %v532 = vmul.f32 %v509, %v204
      %v533 = vmul.f32 %v515, %v204
      %v534 = vmul.f32 %v521, %v204
      %v535 = vmul.f32 %v527, %v204
      %v536 = vsub.f32 %v408, %v528
      %v537 = vsub.f32 %v413, %v529
      %v538 = vsub.f32 %v418, %v530
      %v539 = vsub.f32 %v423, %v531
      %v540 = vsub.f32 %v428, %v532
      %v541 = vsub.f32 %v433, %v533
      %v542 = vsub.f32 %v438, %v534
      %v543 = vsub.f32 %v443, %v535
      %v544 = vmul.f32 %v536, %v536
      %v545 = vmul.f32 %v537, %v537
      %v546 = vmul.f32 %v538, %v538
      %v547 = vmul.f32 %v539, %v539
      %v548 = vmul.f32 %v540, %v540
      %v549 = vmul.f32 %v541, %v541
      %v550 = vmul.f32 %v542, %v542
      %v551 = vmul.f32 %v543, %v543
      %v552 = vsel %vm446, %v544, 0.0
      %553 = vadd.xlane.f32.xlu0 %v552
      %v554 = vpop.xlane.xlu0 %553
      %v555 = vsel %vm446, %v545, 0.0
      %556 = vadd.xlane.f32.xlu0 %v555
      %v557 = vpop.xlane.xlu0 %556
      %v558 = vsel %vm446, %v546, 0.0
      %559 = vadd.xlane.f32.xlu0 %v558
      %v560 = vpop.xlane.xlu0 %559
      %v561 = vsel %vm446, %v547, 0.0
      %562 = vadd.xlane.f32.xlu0 %v561
      %v563 = vpop.xlane.xlu0 %562
      %v564 = vsel %vm446, %v548, 0.0
      %565 = vadd.xlane.f32.xlu0 %v564
      %v566 = vpop.xlane.xlu0 %565
      %v567 = vsel %vm446, %v549, 0.0
      %568 = vadd.xlane.f32.xlu0 %v567
      %v569 = vpop.xlane.xlu0 %568
      %v570 = vsel %vm446, %v550, 0.0
      %571 = vadd.xlane.f32.xlu0 %v570
      %v572 = vpop.xlane.xlu0 %571
      %v573 = vsel %vm446, %v551, 0.0
      %574 = vadd.xlane.f32.xlu0 %v573
      %v575 = vpop.xlane.xlu0 %574
      %v576 = vmul.f32 %v554, %v471
      %v577 = vmul.f32 %v557, %v471
      %v578 = vmul.f32 %v560, %v471
      %v579 = vmul.f32 %v563, %v471
      %v580 = vmul.f32 %v566, %v471
      %v581 = vmul.f32 %v569, %v471
      %v582 = vmul.f32 %v572, %v471
      %v583 = vmul.f32 %v575, %v471
      %v584 = vrot.slane %v576, 4
      %v585 = vadd.f32 %v576, %v584
      %v586 = vrot.slane %v585, 2
      %v587 = vadd.f32 %v585, %v586
      %v588 = vrot.slane %v587, 1
      %v589 = vadd.f32 %v587, %v588
      %v590 = vrot.slane %v577, 4
      %v591 = vadd.f32 %v577, %v590
      %v592 = vrot.slane %v591, 2
      %v593 = vadd.f32 %v591, %v592
      %v594 = vrot.slane %v593, 1
      %v595 = vadd.f32 %v593, %v594
      %v596 = vrot.slane %v578, 4
      %v597 = vadd.f32 %v578, %v596
      %v598 = vrot.slane %v597, 2
      %v599 = vadd.f32 %v597, %v598
      %v600 = vrot.slane %v599, 1
      %v601 = vadd.f32 %v599, %v600
      %v602 = vrot.slane %v579, 4
      %v603 = vadd.f32 %v579, %v602
      %v604 = vrot.slane %v603, 2
      %v605 = vadd.f32 %v603, %v604
      %v606 = vrot.slane %v605, 1
      %v607 = vadd.f32 %v605, %v606
      %v608 = vrot.slane %v580, 4
      %v609 = vadd.f32 %v580, %v608
      %v610 = vrot.slane %v609, 2
      %v611 = vadd.f32 %v609, %v610
      %v612 = vrot.slane %v611, 1
      %v613 = vadd.f32 %v611, %v612
      %v614 = vrot.slane %v581, 4
      %v615 = vadd.f32 %v581, %v614
      %v616 = vrot.slane %v615, 2
      %v617 = vadd.f32 %v615, %v616
      %v618 = vrot.slane %v617, 1
      %v619 = vadd.f32 %v617, %v618
      %v620 = vrot.slane %v582, 4
      %v621 = vadd.f32 %v582, %v620
      %v622 = vrot.slane %v621, 2
      %v623 = vadd.f32 %v621, %v622
      %v624 = vrot.slane %v623, 1
      %v625 = vadd.f32 %v623, %v624
      %v626 = vrot.slane %v583, 4
      %v627 = vadd.f32 %v583, %v626
      %v628 = vrot.slane %v627, 2
      %v629 = vadd.f32 %v627, %v628
      %v630 = vrot.slane %v629, 1
      %v631 = vadd.f32 %v629, %v630
      %v632 = vmul.f32 %v589, %v204
      %v633 = vmul.f32 %v595, %v204
      %v634 = vmul.f32 %v601, %v204
      %v635 = vmul.f32 %v607, %v204
      %v636 = vmul.f32 %v613, %v204
      %v637 = vmul.f32 %v619, %v204
      %v638 = vmul.f32 %v625, %v204
      %v639 = vmul.f32 %v631, %v204
      %v640 = vadd.f32 %v632, 1e-05
      %v641 = vadd.f32 %v633, 1e-05
      %v642 = vadd.f32 %v634, 1e-05
      %v643 = vadd.f32 %v635, 1e-05
      %v644 = vadd.f32 %v636, 1e-05
      %v645 = vadd.f32 %v637, 1e-05
      %v646 = vadd.f32 %v638, 1e-05
      %v647 = vadd.f32 %v639, 1e-05
      %v648 = vrsqrt.pop %v640
      %v649 = vrsqrt.pop %v641
      %v650 = vrsqrt.pop %v642
      %v651 = vrsqrt.pop %v643
      %v652 = vrsqrt.pop %v644
      %v653 = vrsqrt.pop %v645
      %v654 = vrsqrt.pop %v646
      %v655 = vrsqrt.pop %v647
      %v656 = vmul.f32 %v536, %v648
      %v657 = vmul.f32 %v537, %v649
      %v658 = vmul.f32 %v538, %v650
      %v659 = vmul.f32 %v539, %v651
      %v660 = vmul.f32 %v540, %v652
      %v661 = vmul.f32 %v541, %v653
      %v662 = vmul.f32 %v542, %v654
      %v663 = vmul.f32 %v543, %v655
      %v664 = vld [vmem:[%s2 + $0x8] sm:$0xff]
      %v665 = vmul.f32 %v656, %v664
      %v666 = vmul.f32 %v657, %v664
      %v667 = vmul.f32 %v658, %v664
      %v668 = vmul.f32 %v659, %v664
      %v669 = vmul.f32 %v660, %v664
      %v670 = vmul.f32 %v661, %v664
      %v671 = vmul.f32 %v662, %v664
      %v672 = vmul.f32 %v663, %v664
      %v673 = vld [vmem:[%s2 + $0x10] sm:$0xff]
      %v674 = vadd.f32 %v665, %v673
      %v675 = vadd.f32 %v666, %v673
      %v676 = vadd.f32 %v667, %v673
      %v677 = vadd.f32 %v668, %v673
      %v678 = vadd.f32 %v669, %v673
      %v679 = vadd.f32 %v670, %v673
      %v680 = vadd.f32 %v671, %v673
      %v681 = vadd.f32 %v672, %v673
      %v682 = vld [vmem:[%s2 + $0x18] sm:$0xff]
      %v683 = vld [vmem:[%s2 + $0x20] sm:$0xff]
      %v684 = vld [vmem:[%s2 + $0x28] sm:$0xff]
      %v685 = vld [vmem:[%s2 + $0x30] sm:$0xff]
      %v686 = vld [vmem:[%s1 + $0x3] sm:$0x1]
      %v687 = vlaneseq
      %v688 = vshrl.u32 %v687, 7
      %v689 = vsub.s32 0, %v688
      %v690 = vrot.slane %v686, %v689
      %v692 = vsel %vm446, %v674, 0
      %v695 = vsel %vm446, %v675, 0
      %v698 = vsel %vm446, %v676, 0
      %v701 = vsel %vm446, %v677, 0
      %v704 = vsel %vm446, %v678, 0
      %v707 = vsel %vm446, %v679, 0
      %v710 = vsel %vm446, %v680, 0
      %v713 = vsel %vm446, %v681, 0
      %715 = vmatprep.subr.mxu0 0.0
      %716 = vmatpush1.msra.mxu0 %v682
      %717 = vmatprep.subr.mxu0 0.0
      %718 = vmatpush1.msra.mxu0 %v683
      %719 = vmatprep.subr.mxu0 0.0
      %720 = vmatpush1.msra.mxu0 %v684
      %721 = vmatprep.subr.mxu0 0.0
      %722 = vmatpush1.msra.mxu0 %v685
      %723 = vmatprep.subr.mxu0 0.0
      %724 = vmatpush1.msra.mxu0 0.0
      %725 = vmatprep.subr.mxu0 0.0
      %726 = vmatpush1.msra.mxu0 0.0
      %727 = vmatprep.subr.mxu0 0.0
      %728 = vmatpush1.msra.mxu0 0.0
      %729 = vmatprep.subr.mxu0 0.0
      %730 = vmatpush1.msra.mxu0 0.0
      %731 = vmatprep.subr.mxu0 0.0
      %732 = vmatpush1.msra.mxu0 0.0
      %733 = vmatprep.subr.mxu0 0.0
      %734 = vmatpush1.msra.mxu0 0.0
      %735 = vmatprep.subr.mxu0 0.0
      %736 = vmatpush1.msra.mxu0 0.0
      %737 = vmatprep.subr.mxu0 0.0
      %738 = vmatpush1.msra.mxu0 0.0
      %739 = vmatprep.subr.mxu0 0.0
      %740 = vmatpush1.msra.mxu0 0.0
      %741 = vmatprep.subr.mxu0 0.0
      %742 = vmatpush1.msra.mxu0 0.0
      %743 = vmatprep.subr.mxu0 0.0
      %744 = vmatpush1.msra.mxu0 0.0
      %745 = vmatprep.subr.mxu0 0.0
      %746 = vmatpush1.msra.mxu0 0.0
      %747 = vmatprep.subr.mxu0 0.0
      %748 = vmatpush1.msra.mxu0 0.0
      %749 = vmatprep.subr.mxu0 0.0
      %750 = vmatpush1.msra.mxu0 0.0
      %751 = vmatprep.subr.mxu0 0.0
      %752 = vmatpush1.msra.mxu0 0.0
      %753 = vmatprep.subr.mxu0 0.0
      %754 = vmatpush1.msra.mxu0 0.0
      %755 = vmatprep.subr.mxu0 0.0
      %756 = vmatpush1.msra.mxu0 0.0
      %757 = vmatprep.subr.mxu0 0.0
      %758 = vmatpush1.msra.mxu0 0.0
      %759 = vmatprep.subr.mxu0 0.0
      %760 = vmatpush1.msra.mxu0 0.0
      %761 = vmatprep.subr.mxu0 0.0
      %762 = vmatpush1.msra.mxu0 0.0
      %763 = vmatprep.subr.mxu0 0.0
      %764 = vmatpush1.msra.mxu0 0.0
      %765 = vmatprep.subr.mxu0 0.0
      %766 = vmatpush1.msra.mxu0 0.0
      %767 = vmatprep.subr.mxu0 0.0
      %768 = vmatpush1.msra.mxu0 0.0
      %769 = vmatprep.subr.mxu0 0.0
      %770 = vmatpush1.msra.mxu0 0.0
      %771 = vmatprep.subr.mxu0 0.0
      %772 = vmatpush1.msra.mxu0 0.0
      %773 = vmatprep.subr.mxu0 0.0
      %774 = vmatpush1.msra.mxu0 0.0
      %775 = vmatprep.subr.mxu0 0.0
      %776 = vmatpush1.msra.mxu0 0.0
      %777 = vmatprep.subr.mxu0 0.0
      %778 = vmatpush1.msra.mxu0 0.0
      %779 = vmatprep.mubr.f32.mxu0 0.0
      %780 = vmatmul.mubr.f32.gmra.mrb[0].mxu0 %v692
      %v781 = vpop.f32.mrb[0].mxu0
      %v782 = vadd.f32 %v690, %v781
      %v783 = vpop.f32.mrb[0].mxu0
      %784 = vmatprep.mubr.f32.mxu0 0.0
      %785 = vmatmul.mubr.f32.gmra.mrb[0].mxu0 %v695
      %v786 = vpop.f32.mrb[0].mxu0
      %v787 = vadd.f32 %v690, %v786
      %v788 = vpop.f32.mrb[0].mxu0
      %789 = vmatprep.mubr.f32.mxu0 0.0
      %790 = vmatmul.mubr.f32.gmra.mrb[0].mxu0 %v698
      %v791 = vpop.f32.mrb[0].mxu0
      %v792 = vadd.f32 %v690, %v791
      %v793 = vpop.f32.mrb[0].mxu0
      %794 = vmatprep.mubr.f32.mxu0 0.0
      %795 = vmatmul.mubr.f32.gmra.mrb[0].mxu0 %v701
      %v796 = vpop.f32.mrb[0].mxu0
      %v797 = vadd.f32 %v690, %v796
      %v798 = vpop.f32.mrb[0].mxu0
      %799 = vmatprep.mubr.f32.mxu0 0.0
      %800 = vmatmul.mubr.f32.gmra.mrb[0].mxu0 %v704
      %v801 = vpop.f32.mrb[0].mxu0
      %v802 = vadd.f32 %v690, %v801
      %v803 = vpop.f32.mrb[0].mxu0
      %804 = vmatprep.mubr.f32.mxu0 0.0
      %805 = vmatmul.mubr.f32.gmra.mrb[0].mxu0 %v707
      %v806 = vpop.f32.mrb[0].mxu0
      %v807 = vadd.f32 %v690, %v806
      %v808 = vpop.f32.mrb[0].mxu0
      %809 = vmatprep.mubr.f32.mxu0 0.0
      %810 = vmatmul.mubr.f32.gmra.mrb[0].mxu0 %v710
      %v811 = vpop.f32.mrb[0].mxu0
      %v812 = vadd.f32 %v690, %v811
      %v813 = vpop.f32.mrb[0].mxu0
      %814 = vmatprep.mubr.f32.mxu0 0.0
      %815 = vmatmul.mubr.f32.gmra.mrb[0].mxu0 %v713
      %v816 = vpop.f32.mrb[0].mxu0
      %v817 = vadd.f32 %v690, %v816
      %v818 = vpop.f32.mrb[0].mxu0
      %819 = vdwg.mxu0
      %v820 = vld [vmem:[%s1 + $0x4] sm:$0x1]
      %v821 = vlaneseq
      %v822 = vshrl.u32 %v821, 7
      %v823 = vsub.s32 0, %v822
      %v824 = vrot.slane %v820, %v823
      %v825 = vmul.f32 %v782, %v824
      %v826 = vmul.f32 %v787, %v824
      %v827 = vmul.f32 %v792, %v824
      %v828 = vmul.f32 %v797, %v824
      %v829 = vmul.f32 %v802, %v824
      %v830 = vmul.f32 %v807, %v824
      %v831 = vmul.f32 %v812, %v824
      %v832 = vmul.f32 %v817, %v824
      %v833 = vsel %vm179, %v825, 0.0
      %834 = vadd.xlane.f32.xlu0 %v833
      %v835 = vpop.xlane.xlu0 %834
      %v836 = vsel %vm179, %v826, 0.0
      %837 = vadd.xlane.f32.xlu0 %v836
      %v838 = vpop.xlane.xlu0 %837
      %v839 = vsel %vm179, %v827, 0.0
      %840 = vadd.xlane.f32.xlu0 %v839
      %v841 = vpop.xlane.xlu0 %840
      %v842 = vsel %vm179, %v828, 0.0
      %843 = vadd.xlane.f32.xlu0 %v842
      %v844 = vpop.xlane.xlu0 %843
      %v845 = vsel %vm179, %v829, 0.0
      %846 = vadd.xlane.f32.xlu0 %v845
      %v847 = vpop.xlane.xlu0 %846
      %v848 = vsel %vm179, %v830, 0.0
      %849 = vadd.xlane.f32.xlu0 %v848
      %v850 = vpop.xlane.xlu0 %849
      %v851 = vsel %vm179, %v831, 0.0
      %852 = vadd.xlane.f32.xlu0 %v851
      %v853 = vpop.xlane.xlu0 %852
      %v854 = vsel %vm179, %v832, 0.0
      %855 = vadd.xlane.f32.xlu0 %v854
      %v856 = vpop.xlane.xlu0 %855
      %v857 = vrot.slane %v835, 4
      %v858 = vmax.f32 %v835, %v857
      %v859 = vrot.slane %v858, 2
      %v860 = vmax.f32 %v858, %v859
      %v861 = vrot.slane %v860, 1
      %v862 = vmax.f32 %v860, %v861
      %v863 = vrot.slane %v838, 4
      %v864 = vmax.f32 %v838, %v863
      %v865 = vrot.slane %v864, 2
      %v866 = vmax.f32 %v864, %v865
      %v867 = vrot.slane %v866, 1
      %v868 = vmax.f32 %v866, %v867
      %v869 = vrot.slane %v841, 4
      %v870 = vmax.f32 %v841, %v869
      %v871 = vrot.slane %v870, 2
      %v872 = vmax.f32 %v870, %v871
      %v873 = vrot.slane %v872, 1
      %v874 = vmax.f32 %v872, %v873
      %v875 = vrot.slane %v844, 4
      %v876 = vmax.f32 %v844, %v875
      %v877 = vrot.slane %v876, 2
      %v878 = vmax.f32 %v876, %v877
      %v879 = vrot.slane %v878, 1
      %v880 = vmax.f32 %v878, %v879
      %v881 = vrot.slane %v847, 4
      %v882 = vmax.f32 %v847, %v881
      %v883 = vrot.slane %v882, 2
      %v884 = vmax.f32 %v882, %v883
      %v885 = vrot.slane %v884, 1
      %v886 = vmax.f32 %v884, %v885
      %v887 = vrot.slane %v850, 4
      %v888 = vmax.f32 %v850, %v887
      %v889 = vrot.slane %v888, 2
      %v890 = vmax.f32 %v888, %v889
      %v891 = vrot.slane %v890, 1
      %v892 = vmax.f32 %v890, %v891
      %v893 = vrot.slane %v853, 4
      %v894 = vmax.f32 %v853, %v893
      %v895 = vrot.slane %v894, 2
      %v896 = vmax.f32 %v894, %v895
      %v897 = vrot.slane %v896, 1
      %v898 = vmax.f32 %v896, %v897
      %v899 = vrot.slane %v856, 4
      %v900 = vmax.f32 %v856, %v899
      %v901 = vrot.slane %v900, 2
      %v902 = vmax.f32 %v900, %v901
      %v903 = vrot.slane %v902, 1
      %v904 = vmax.f32 %v902, %v903
      %v905 = vsub.f32 %v835, %v862
      %v906 = vsub.f32 %v838, %v868
      %v907 = vsub.f32 %v841, %v874
      %v908 = vsub.f32 %v844, %v880
      %v909 = vsub.f32 %v847, %v886
      %v910 = vsub.f32 %v850, %v892
      %v911 = vsub.f32 %v853, %v898
      %v912 = vsub.f32 %v856, %v904
      %v913 = vmul.f32 %v905, 1.442695
      %v914 = vpow.pop %v913
      %v915 = vmul.f32 %v906, 1.442695
      %v916 = vpow.pop %v915
      %v917 = vmul.f32 %v907, 1.442695
      %v918 = vpow.pop %v917
      %v919 = vmul.f32 %v908, 1.442695
      %v920 = vpow.pop %v919
      %v921 = vmul.f32 %v909, 1.442695
      %v922 = vpow.pop %v921
      %v923 = vmul.f32 %v910, 1.442695
      %v924 = vpow.pop %v923
      %v925 = vmul.f32 %v911, 1.442695
      %v926 = vpow.pop %v925
      %v927 = vmul.f32 %v912, 1.442695
      %v928 = vpow.pop %v927
      %v929 = vrot.slane %v914, 4
      %v930 = vadd.f32 %v914, %v929
      %v931 = vrot.slane %v930, 2
      %v932 = vadd.f32 %v930, %v931
      %v933 = vrot.slane %v932, 1
      %v934 = vadd.f32 %v932, %v933
      %v935 = vrot.slane %v916, 4
      %v936 = vadd.f32 %v916, %v935
      %v937 = vrot.slane %v936, 2
      %v938 = vadd.f32 %v936, %v937
      %v939 = vrot.slane %v938, 1
      %v940 = vadd.f32 %v938, %v939
      %v941 = vrot.slane %v918, 4
      %v942 = vadd.f32 %v918, %v941
      %v943 = vrot.slane %v942, 2
      %v944 = vadd.f32 %v942, %v943
      %v945 = vrot.slane %v944, 1
      %v946 = vadd.f32 %v944, %v945
      %v947 = vrot.slane %v920, 4
      %v948 = vadd.f32 %v920, %v947
      %v949 = vrot.slane %v948, 2
      %v950 = vadd.f32 %v948, %v949
      %v951 = vrot.slane %v950, 1
      %v952 = vadd.f32 %v950, %v951
      %v953 = vrot.slane %v922, 4
      %v954 = vadd.f32 %v922, %v953
      %v955 = vrot.slane %v954, 2
      %v956 = vadd.f32 %v954, %v955
      %v957 = vrot.slane %v956, 1
      %v958 = vadd.f32 %v956, %v957
      %v959 = vrot.slane %v924, 4
      %v960 = vadd.f32 %v924, %v959
      %v961 = vrot.slane %v960, 2
      %v962 = vadd.f32 %v960, %v961
      %v963 = vrot.slane %v962, 1
      %v964 = vadd.f32 %v962, %v963
      %v965 = vrot.slane %v926, 4
      %v966 = vadd.f32 %v926, %v965
      %v967 = vrot.slane %v966, 2
      %v968 = vadd.f32 %v966, %v967
      %v969 = vrot.slane %v968, 1
      %v970 = vadd.f32 %v968, %v969
      %v971 = vrot.slane %v928, 4
      %v972 = vadd.f32 %v928, %v971
      %v973 = vrot.slane %v972, 2
      %v974 = vadd.f32 %v972, %v973
      %v975 = vrot.slane %v974, 1
      %v976 = vadd.f32 %v974, %v975
      %v977 = vrcp.pop %v934
      %v978 = vmul.f32 %v914, %v977
      %v979 = vrcp.pop %v940
      %v980 = vmul.f32 %v916, %v979
      %v981 = vrcp.pop %v946
      %v982 = vmul.f32 %v918, %v981
      %v983 = vrcp.pop %v952
      %v984 = vmul.f32 %v920, %v983
      %v985 = vrcp.pop %v958
      %v986 = vmul.f32 %v922, %v985
      %v987 = vrcp.pop %v964
      %v988 = vmul.f32 %v924, %v987
      %v989 = vrcp.pop %v970
      %v990 = vmul.f32 %v926, %v989
      %v991 = vrcp.pop %v976
      %v992 = vmul.f32 %v928, %v991
      %v993 = vmul.f32 %v978, %v674
      %v994 = vmul.f32 %v980, %v675
      %v995 = vmul.f32 %v982, %v676
      %v996 = vmul.f32 %v984, %v677
      %v997 = vmul.f32 %v986, %v678
      %v998 = vmul.f32 %v988, %v679
      %v999 = vmul.f32 %v990, %v680
      %v1000 = vmul.f32 %v992, %v681
      %v1001 = vsel %vm179, %v993, 0.0
      %v1002 = vrot.slane %v1001, 4
      %v1003 = vadd.f32 %v1001, %v1002
      %v1004 = vrot.slane %v1003, 2
      %v1005 = vadd.f32 %v1003, %v1004
      %v1006 = vrot.slane %v1005, 1
      %v1007 = vadd.f32 %v1005, %v1006
      %v1008 = vsel %vm179, %v994, 0.0
      %v1009 = vrot.slane %v1008, 4
      %v1010 = vadd.f32 %v1008, %v1009
      %v1011 = vrot.slane %v1010, 2
      %v1012 = vadd.f32 %v1010, %v1011
      %v1013 = vrot.slane %v1012, 1
      %v1014 = vadd.f32 %v1012, %v1013
      %v1015 = vsel %vm179, %v995, 0.0
      %v1016 = vrot.slane %v1015, 4
      %v1017 = vadd.f32 %v1015, %v1016
      %v1018 = vrot.slane %v1017, 2
      %v1019 = vadd.f32 %v1017, %v1018
      %v1020 = vrot.slane %v1019, 1
      %v1021 = vadd.f32 %v1019, %v1020
      %v1022 = vsel %vm179, %v996, 0.0
      %v1023 = vrot.slane %v1022, 4
      %v1024 = vadd.f32 %v1022, %v1023
      %v1025 = vrot.slane %v1024, 2
      %v1026 = vadd.f32 %v1024, %v1025
      %v1027 = vrot.slane %v1026, 1
      %v1028 = vadd.f32 %v1026, %v1027
      %v1029 = vsel %vm179, %v997, 0.0
      %v1030 = vrot.slane %v1029, 4
      %v1031 = vadd.f32 %v1029, %v1030
      %v1032 = vrot.slane %v1031, 2
      %v1033 = vadd.f32 %v1031, %v1032
      %v1034 = vrot.slane %v1033, 1
      %v1035 = vadd.f32 %v1033, %v1034
      %v1036 = vsel %vm179, %v998, 0.0
      %v1037 = vrot.slane %v1036, 4
      %v1038 = vadd.f32 %v1036, %v1037
      %v1039 = vrot.slane %v1038, 2
      %v1040 = vadd.f32 %v1038, %v1039
      %v1041 = vrot.slane %v1040, 1
      %v1042 = vadd.f32 %v1040, %v1041
      %v1043 = vsel %vm179, %v999, 0.0
      %v1044 = vrot.slane %v1043, 4
      %v1045 = vadd.f32 %v1043, %v1044
      %v1046 = vrot.slane %v1045, 2
      %v1047 = vadd.f32 %v1045, %v1046
      %v1048 = vrot.slane %v1047, 1
      %v1049 = vadd.f32 %v1047, %v1048
      %v1050 = vsel %vm179, %v1000, 0.0
      %v1051 = vrot.slane %v1050, 4
      %v1052 = vadd.f32 %v1050, %v1051
      %v1053 = vrot.slane %v1052, 2
      %v1054 = vadd.f32 %v1052, %v1053
      %v1055 = vrot.slane %v1054, 1
      %v1056 = vadd.f32 %v1054, %v1055
      %1065 = vrot.lane.b32.xlu0 %v825, 120
      %v1066 = vpop.permute.xlu0 %1065
      %1067 = vrot.lane.b32.xlu0 %v826, 120
      %v1068 = vpop.permute.xlu0 %1067
      %1069 = vrot.lane.b32.xlu0 %v827, 120
      %v1070 = vpop.permute.xlu0 %1069
      %1071 = vrot.lane.b32.xlu0 %v828, 120
      %v1072 = vpop.permute.xlu0 %1071
      %1073 = vrot.lane.b32.xlu0 %v829, 120
      %v1074 = vpop.permute.xlu0 %1073
      %1075 = vrot.lane.b32.xlu0 %v830, 120
      %v1076 = vpop.permute.xlu0 %1075
      %1077 = vrot.lane.b32.xlu0 %v831, 120
      %v1078 = vpop.permute.xlu0 %1077
      %1079 = vrot.lane.b32.xlu0 %v832, 120
      %v1080 = vpop.permute.xlu0 %1079
      %v1089 = vsel %vm179, %v1066, 0.0
      %1090 = vadd.xlane.f32.xlu0 %v1089
      %v1091 = vpop.xlane.xlu0 %1090
      %v1092 = vsel %vm179, %v1068, 0.0
      %1093 = vadd.xlane.f32.xlu0 %v1092
      %v1094 = vpop.xlane.xlu0 %1093
      %v1095 = vsel %vm179, %v1070, 0.0
      %1096 = vadd.xlane.f32.xlu0 %v1095
      %v1097 = vpop.xlane.xlu0 %1096
      %v1098 = vsel %vm179, %v1072, 0.0
      %1099 = vadd.xlane.f32.xlu0 %v1098
      %v1100 = vpop.xlane.xlu0 %1099
      %v1101 = vsel %vm179, %v1074, 0.0
      %1102 = vadd.xlane.f32.xlu0 %v1101
      %v1103 = vpop.xlane.xlu0 %1102
      %v1104 = vsel %vm179, %v1076, 0.0
      %1105 = vadd.xlane.f32.xlu0 %v1104
      %v1106 = vpop.xlane.xlu0 %1105
      %v1107 = vsel %vm179, %v1078, 0.0
      %1108 = vadd.xlane.f32.xlu0 %v1107
      %v1109 = vpop.xlane.xlu0 %1108
      %v1110 = vsel %vm179, %v1080, 0.0
      %1111 = vadd.xlane.f32.xlu0 %v1110
      %v1112 = vpop.xlane.xlu0 %1111
      %v1113 = vrot.slane %v1091, 4
      %v1114 = vmax.f32 %v1091, %v1113
      %v1115 = vrot.slane %v1114, 2
      %v1116 = vmax.f32 %v1114, %v1115
      %v1117 = vrot.slane %v1116, 1
      %v1118 = vmax.f32 %v1116, %v1117
      %v1119 = vrot.slane %v1094, 4
      %v1120 = vmax.f32 %v1094, %v1119
      %v1121 = vrot.slane %v1120, 2
      %v1122 = vmax.f32 %v1120, %v1121
      %v1123 = vrot.slane %v1122, 1
      %v1124 = vmax.f32 %v1122, %v1123
      %v1125 = vrot.slane %v1097, 4
      %v1126 = vmax.f32 %v1097, %v1125
      %v1127 = vrot.slane %v1126, 2
      %v1128 = vmax.f32 %v1126, %v1127
      %v1129 = vrot.slane %v1128, 1
      %v1130 = vmax.f32 %v1128, %v1129
      %v1131 = vrot.slane %v1100, 4
      %v1132 = vmax.f32 %v1100, %v1131
      %v1133 = vrot.slane %v1132, 2
      %v1134 = vmax.f32 %v1132, %v1133
      %v1135 = vrot.slane %v1134, 1
      %v1136 = vmax.f32 %v1134, %v1135
      %v1137 = vrot.slane %v1103, 4
      %v1138 = vmax.f32 %v1103, %v1137
      %v1139 = vrot.slane %v1138, 2
      %v1140 = vmax.f32 %v1138, %v1139
      %v1141 = vrot.slane %v1140, 1
      %v1142 = vmax.f32 %v1140, %v1141
      %v1143 = vrot.slane %v1106, 4
      %v1144 = vmax.f32 %v1106, %v1143
      %v1145 = vrot.slane %v1144, 2
      %v1146 = vmax.f32 %v1144, %v1145
      %v1147 = vrot.slane %v1146, 1
      %v1148 = vmax.f32 %v1146, %v1147
      %v1149 = vrot.slane %v1109, 4
      %v1150 = vmax.f32 %v1109, %v1149
      %v1151 = vrot.slane %v1150, 2
      %v1152 = vmax.f32 %v1150, %v1151
      %v1153 = vrot.slane %v1152, 1
      %v1154 = vmax.f32 %v1152, %v1153
      %v1155 = vrot.slane %v1112, 4
      %v1156 = vmax.f32 %v1112, %v1155
      %v1157 = vrot.slane %v1156, 2
      %v1158 = vmax.f32 %v1156, %v1157
      %v1159 = vrot.slane %v1158, 1
      %v1160 = vmax.f32 %v1158, %v1159
      %v1161 = vsub.f32 %v1091, %v1118
      %v1162 = vsub.f32 %v1094, %v1124
      %v1163 = vsub.f32 %v1097, %v1130
      %v1164 = vsub.f32 %v1100, %v1136
      %v1165 = vsub.f32 %v1103, %v1142
      %v1166 = vsub.f32 %v1106, %v1148
      %v1167 = vsub.f32 %v1109, %v1154
      %v1168 = vsub.f32 %v1112, %v1160
      %v1169 = vmul.f32 %v1161, 1.442695
      %v1170 = vpow.pop %v1169
      %v1171 = vmul.f32 %v1162, 1.442695
      %v1172 = vpow.pop %v1171
      %v1173 = vmul.f32 %v1163, 1.442695
      %v1174 = vpow.pop %v1173
      %v1175 = vmul.f32 %v1164, 1.442695
      %v1176 = vpow.pop %v1175
      %v1177 = vmul.f32 %v1165, 1.442695
      %v1178 = vpow.pop %v1177
      %v1179 = vmul.f32 %v1166, 1.442695
      %v1180 = vpow.pop %v1179
      %v1181 = vmul.f32 %v1167, 1.442695
      %v1182 = vpow.pop %v1181
      %v1183 = vmul.f32 %v1168, 1.442695
      %v1184 = vpow.pop %v1183
      %v1185 = vrot.slane %v1170, 4
      %v1186 = vadd.f32 %v1170, %v1185
      %v1187 = vrot.slane %v1186, 2
      %v1188 = vadd.f32 %v1186, %v1187
      %v1189 = vrot.slane %v1188, 1
      %v1190 = vadd.f32 %v1188, %v1189
      %v1191 = vrot.slane %v1172, 4
      %v1192 = vadd.f32 %v1172, %v1191
      %v1193 = vrot.slane %v1192, 2
      %v1194 = vadd.f32 %v1192, %v1193
      %v1195 = vrot.slane %v1194, 1
      %v1196 = vadd.f32 %v1194, %v1195
      %v1197 = vrot.slane %v1174, 4
      %v1198 = vadd.f32 %v1174, %v1197
      %v1199 = vrot.slane %v1198, 2
      %v1200 = vadd.f32 %v1198, %v1199
      %v1201 = vrot.slane %v1200, 1
      %v1202 = vadd.f32 %v1200, %v1201
      %v1203 = vrot.slane %v1176, 4
      %v1204 = vadd.f32 %v1176, %v1203
      %v1205 = vrot.slane %v1204, 2
      %v1206 = vadd.f32 %v1204, %v1205
      %v1207 = vrot.slane %v1206, 1
      %v1208 = vadd.f32 %v1206, %v1207
      %v1209 = vrot.slane %v1178, 4
      %v1210 = vadd.f32 %v1178, %v1209
      %v1211 = vrot.slane %v1210, 2
      %v1212 = vadd.f32 %v1210, %v1211
      %v1213 = vrot.slane %v1212, 1
      %v1214 = vadd.f32 %v1212, %v1213
      %v1215 = vrot.slane %v1180, 4
      %v1216 = vadd.f32 %v1180, %v1215
      %v1217 = vrot.slane %v1216, 2
      %v1218 = vadd.f32 %v1216, %v1217
      %v1219 = vrot.slane %v1218, 1
      %v1220 = vadd.f32 %v1218, %v1219
      %v1221 = vrot.slane %v1182, 4
      %v1222 = vadd.f32 %v1182, %v1221
      %v1223 = vrot.slane %v1222, 2
      %v1224 = vadd.f32 %v1222, %v1223
      %v1225 = vrot.slane %v1224, 1
      %v1226 = vadd.f32 %v1224, %v1225
      %v1227 = vrot.slane %v1184, 4
      %v1228 = vadd.f32 %v1184, %v1227
      %v1229 = vrot.slane %v1228, 2
      %v1230 = vadd.f32 %v1228, %v1229
      %v1231 = vrot.slane %v1230, 1
      %v1232 = vadd.f32 %v1230, %v1231
      %v1233 = vrcp.pop %v1190
      %v1234 = vmul.f32 %v1170, %v1233
      %v1235 = vrcp.pop %v1196
      %v1236 = vmul.f32 %v1172, %v1235
      %v1237 = vrcp.pop %v1202
      %v1238 = vmul.f32 %v1174, %v1237
      %v1239 = vrcp.pop %v1208
      %v1240 = vmul.f32 %v1176, %v1239
      %v1241 = vrcp.pop %v1214
      %v1242 = vmul.f32 %v1178, %v1241
      %v1243 = vrcp.pop %v1220
      %v1244 = vmul.f32 %v1180, %v1243
      %v1245 = vrcp.pop %v1226
      %v1246 = vmul.f32 %v1182, %v1245
      %v1247 = vrcp.pop %v1232
      %v1248 = vmul.f32 %v1184, %v1247
      %v1249 = vmul.f32 %v1234, %v674
      %v1250 = vmul.f32 %v1236, %v675
      %v1251 = vmul.f32 %v1238, %v676
      %v1252 = vmul.f32 %v1240, %v677
      %v1253 = vmul.f32 %v1242, %v678
      %v1254 = vmul.f32 %v1244, %v679
      %v1255 = vmul.f32 %v1246, %v680
      %v1256 = vmul.f32 %v1248, %v681
      %vm1257 = vcmask 130112
      %v1258 = vsel %vm1257, %v1249, 0.0
      %v1259 = vrot.slane %v1258, 4
      %v1260 = vadd.f32 %v1258, %v1259
      %v1261 = vrot.slane %v1260, 2
      %v1262 = vadd.f32 %v1260, %v1261
      %v1263 = vrot.slane %v1262, 1
      %v1264 = vadd.f32 %v1262, %v1263
      %v1265 = vsel %vm1257, %v1250, 0.0
      %v1266 = vrot.slane %v1265, 4
      %v1267 = vadd.f32 %v1265, %v1266
      %v1268 = vrot.slane %v1267, 2
      %v1269 = vadd.f32 %v1267, %v1268
      %v1270 = vrot.slane %v1269, 1
      %v1271 = vadd.f32 %v1269, %v1270
      %v1272 = vsel %vm1257, %v1251, 0.0
      %v1273 = vrot.slane %v1272, 4
      %v1274 = vadd.f32 %v1272, %v1273
      %v1275 = vrot.slane %v1274, 2
      %v1276 = vadd.f32 %v1274, %v1275
      %v1277 = vrot.slane %v1276, 1
      %v1278 = vadd.f32 %v1276, %v1277
      %v1279 = vsel %vm1257, %v1252, 0.0
      %v1280 = vrot.slane %v1279, 4
      %v1281 = vadd.f32 %v1279, %v1280
      %v1282 = vrot.slane %v1281, 2
      %v1283 = vadd.f32 %v1281, %v1282
      %v1284 = vrot.slane %v1283, 1
      %v1285 = vadd.f32 %v1283, %v1284
      %v1286 = vsel %vm1257, %v1253, 0.0
      %v1287 = vrot.slane %v1286, 4
      %v1288 = vadd.f32 %v1286, %v1287
      %v1289 = vrot.slane %v1288, 2
      %v1290 = vadd.f32 %v1288, %v1289
      %v1291 = vrot.slane %v1290, 1
      %v1292 = vadd.f32 %v1290, %v1291
      %v1293 = vsel %vm1257, %v1254, 0.0
      %v1294 = vrot.slane %v1293, 4
      %v1295 = vadd.f32 %v1293, %v1294
      %v1296 = vrot.slane %v1295, 2
      %v1297 = vadd.f32 %v1295, %v1296
      %v1298 = vrot.slane %v1297, 1
      %v1299 = vadd.f32 %v1297, %v1298
      %v1300 = vsel %vm1257, %v1255, 0.0
      %v1301 = vrot.slane %v1300, 4
      %v1302 = vadd.f32 %v1300, %v1301
      %v1303 = vrot.slane %v1302, 2
      %v1304 = vadd.f32 %v1302, %v1303
      %v1305 = vrot.slane %v1304, 1
      %v1306 = vadd.f32 %v1304, %v1305
      %v1307 = vsel %vm1257, %v1256, 0.0
      %v1308 = vrot.slane %v1307, 4
      %v1309 = vadd.f32 %v1307, %v1308
      %v1310 = vrot.slane %v1309, 2
      %v1311 = vadd.f32 %v1309, %v1310
      %v1312 = vrot.slane %v1311, 1
      %v1313 = vadd.f32 %v1311, %v1312
      %1314 = vrot.lane.b32.xlu0 %v825, 112
      %v1315 = vpop.permute.xlu0 %1314
      %1316 = vrot.lane.b32.xlu0 %v826, 112
      %v1317 = vpop.permute.xlu0 %1316
      %1318 = vrot.lane.b32.xlu0 %v827, 112
      %v1319 = vpop.permute.xlu0 %1318
      %1320 = vrot.lane.b32.xlu0 %v828, 112
      %v1321 = vpop.permute.xlu0 %1320
      %1322 = vrot.lane.b32.xlu0 %v829, 112
      %v1323 = vpop.permute.xlu0 %1322
      %1324 = vrot.lane.b32.xlu0 %v830, 112
      %v1325 = vpop.permute.xlu0 %1324
      %1326 = vrot.lane.b32.xlu0 %v831, 112
      %v1327 = vpop.permute.xlu0 %1326
      %1328 = vrot.lane.b32.xlu0 %v832, 112
      %v1329 = vpop.permute.xlu0 %1328
      %v1338 = vsel %vm179, %v1315, 0.0
      %1339 = vadd.xlane.f32.xlu0 %v1338
      %v1340 = vpop.xlane.xlu0 %1339
      %v1341 = vsel %vm179, %v1317, 0.0
      %1342 = vadd.xlane.f32.xlu0 %v1341
      %v1343 = vpop.xlane.xlu0 %1342
      %v1344 = vsel %vm179, %v1319, 0.0
      %1345 = vadd.xlane.f32.xlu0 %v1344
      %v1346 = vpop.xlane.xlu0 %1345
      %v1347 = vsel %vm179, %v1321, 0.0
      %1348 = vadd.xlane.f32.xlu0 %v1347
      %v1349 = vpop.xlane.xlu0 %1348
      %v1350 = vsel %vm179, %v1323, 0.0
      %1351 = vadd.xlane.f32.xlu0 %v1350
      %v1352 = vpop.xlane.xlu0 %1351
      %v1353 = vsel %vm179, %v1325, 0.0
      %1354 = vadd.xlane.f32.xlu0 %v1353
      %v1355 = vpop.xlane.xlu0 %1354
      %v1356 = vsel %vm179, %v1327, 0.0
      %1357 = vadd.xlane.f32.xlu0 %v1356
      %v1358 = vpop.xlane.xlu0 %1357
      %v1359 = vsel %vm179, %v1329, 0.0
      %1360 = vadd.xlane.f32.xlu0 %v1359
      %v1361 = vpop.xlane.xlu0 %1360
      %v1362 = vrot.slane %v1340, 4
      %v1363 = vmax.f32 %v1340, %v1362
      %v1364 = vrot.slane %v1363, 2
      %v1365 = vmax.f32 %v1363, %v1364
      %v1366 = vrot.slane %v1365, 1
      %v1367 = vmax.f32 %v1365, %v1366
      %v1368 = vrot.slane %v1343, 4
      %v1369 = vmax.f32 %v1343, %v1368
      %v1370 = vrot.slane %v1369, 2
      %v1371 = vmax.f32 %v1369, %v1370
      %v1372 = vrot.slane %v1371, 1
      %v1373 = vmax.f32 %v1371, %v1372
      %v1374 = vrot.slane %v1346, 4
      %v1375 = vmax.f32 %v1346, %v1374
      %v1376 = vrot.slane %v1375, 2
      %v1377 = vmax.f32 %v1375, %v1376
      %v1378 = vrot.slane %v1377, 1
      %v1379 = vmax.f32 %v1377, %v1378
      %v1380 = vrot.slane %v1349, 4
      %v1381 = vmax.f32 %v1349, %v1380
      %v1382 = vrot.slane %v1381, 2
      %v1383 = vmax.f32 %v1381, %v1382
      %v1384 = vrot.slane %v1383, 1
      %v1385 = vmax.f32 %v1383, %v1384
      %v1386 = vrot.slane %v1352, 4
      %v1387 = vmax.f32 %v1352, %v1386
      %v1388 = vrot.slane %v1387, 2
      %v1389 = vmax.f32 %v1387, %v1388
      %v1390 = vrot.slane %v1389, 1
      %v1391 = vmax.f32 %v1389, %v1390
      %v1392 = vrot.slane %v1355, 4
      %v1393 = vmax.f32 %v1355, %v1392
      %v1394 = vrot.slane %v1393, 2
      %v1395 = vmax.f32 %v1393, %v1394
      %v1396 = vrot.slane %v1395, 1
      %v1397 = vmax.f32 %v1395, %v1396
      %v1398 = vrot.slane %v1358, 4
      %v1399 = vmax.f32 %v1358, %v1398
      %v1400 = vrot.slane %v1399, 2
      %v1401 = vmax.f32 %v1399, %v1400
      %v1402 = vrot.slane %v1401, 1
      %v1403 = vmax.f32 %v1401, %v1402
      %v1404 = vrot.slane %v1361, 4
      %v1405 = vmax.f32 %v1361, %v1404
      %v1406 = vrot.slane %v1405, 2
      %v1407 = vmax.f32 %v1405, %v1406
      %v1408 = vrot.slane %v1407, 1
      %v1409 = vmax.f32 %v1407, %v1408
      %v1410 = vsub.f32 %v1340, %v1367
      %v1411 = vsub.f32 %v1343, %v1373
      %v1412 = vsub.f32 %v1346, %v1379
      %v1413 = vsub.f32 %v1349, %v1385
      %v1414 = vsub.f32 %v1352, %v1391
      %v1415 = vsub.f32 %v1355, %v1397
      %v1416 = vsub.f32 %v1358, %v1403
      %v1417 = vsub.f32 %v1361, %v1409
      %v1418 = vmul.f32 %v1410, 1.442695
      %v1419 = vpow.pop %v1418
      %v1420 = vmul.f32 %v1411, 1.442695
      %v1421 = vpow.pop %v1420
      %v1422 = vmul.f32 %v1412, 1.442695
      %v1423 = vpow.pop %v1422
      %v1424 = vmul.f32 %v1413, 1.442695
      %v1425 = vpow.pop %v1424
      %v1426 = vmul.f32 %v1414, 1.442695
      %v1427 = vpow.pop %v1426
      %v1428 = vmul.f32 %v1415, 1.442695
      %v1429 = vpow.pop %v1428
      %v1430 = vmul.f32 %v1416, 1.442695
      %v1431 = vpow.pop %v1430
      %v1432 = vmul.f32 %v1417, 1.442695
      %v1433 = vpow.pop %v1432
      %v1434 = vrot.slane %v1419, 4
      %v1435 = vadd.f32 %v1419, %v1434
      %v1436 = vrot.slane %v1435, 2
      %v1437 = vadd.f32 %v1435, %v1436
      %v1438 = vrot.slane %v1437, 1
      %v1439 = vadd.f32 %v1437, %v1438
      %v1440 = vrot.slane %v1421, 4
      %v1441 = vadd.f32 %v1421, %v1440
      %v1442 = vrot.slane %v1441, 2
      %v1443 = vadd.f32 %v1441, %v1442
      %v1444 = vrot.slane %v1443, 1
      %v1445 = vadd.f32 %v1443, %v1444
      %v1446 = vrot.slane %v1423, 4
      %v1447 = vadd.f32 %v1423, %v1446
      %v1448 = vrot.slane %v1447, 2
      %v1449 = vadd.f32 %v1447, %v1448
      %v1450 = vrot.slane %v1449, 1
      %v1451 = vadd.f32 %v1449, %v1450
      %v1452 = vrot.slane %v1425, 4
      %v1453 = vadd.f32 %v1425, %v1452
      %v1454 = vrot.slane %v1453, 2
      %v1455 = vadd.f32 %v1453, %v1454
      %v1456 = vrot.slane %v1455, 1
      %v1457 = vadd.f32 %v1455, %v1456
      %v1458 = vrot.slane %v1427, 4
      %v1459 = vadd.f32 %v1427, %v1458
      %v1460 = vrot.slane %v1459, 2
      %v1461 = vadd.f32 %v1459, %v1460
      %v1462 = vrot.slane %v1461, 1
      %v1463 = vadd.f32 %v1461, %v1462
      %v1464 = vrot.slane %v1429, 4
      %v1465 = vadd.f32 %v1429, %v1464
      %v1466 = vrot.slane %v1465, 2
      %v1467 = vadd.f32 %v1465, %v1466
      %v1468 = vrot.slane %v1467, 1
      %v1469 = vadd.f32 %v1467, %v1468
      %v1470 = vrot.slane %v1431, 4
      %v1471 = vadd.f32 %v1431, %v1470
      %v1472 = vrot.slane %v1471, 2
      %v1473 = vadd.f32 %v1471, %v1472
      %v1474 = vrot.slane %v1473, 1
      %v1475 = vadd.f32 %v1473, %v1474
      %v1476 = vrot.slane %v1433, 4
      %v1477 = vadd.f32 %v1433, %v1476
      %v1478 = vrot.slane %v1477, 2
      %v1479 = vadd.f32 %v1477, %v1478
      %v1480 = vrot.slane %v1479, 1
      %v1481 = vadd.f32 %v1479, %v1480
      %v1482 = vrcp.pop %v1439
      %v1483 = vmul.f32 %v1419, %v1482
      %v1484 = vrcp.pop %v1445
      %v1485 = vmul.f32 %v1421, %v1484
      %v1486 = vrcp.pop %v1451
      %v1487 = vmul.f32 %v1423, %v1486
      %v1488 = vrcp.pop %v1457
      %v1489 = vmul.f32 %v1425, %v1488
      %v1490 = vrcp.pop %v1463
      %v1491 = vmul.f32 %v1427, %v1490
      %v1492 = vrcp.pop %v1469
      %v1493 = vmul.f32 %v1429, %v1492
      %v1494 = vrcp.pop %v1475
      %v1495 = vmul.f32 %v1431, %v1494
      %v1496 = vrcp.pop %v1481
      %v1497 = vmul.f32 %v1433, %v1496
      %v1498 = vmul.f32 %v1483, %v674
      %v1499 = vmul.f32 %v1485, %v675
      %v1500 = vmul.f32 %v1487, %v676
      %v1501 = vmul.f32 %v1489, %v677
      %v1502 = vmul.f32 %v1491, %v678
      %v1503 = vmul.f32 %v1493, %v679
      %v1504 = vmul.f32 %v1495, %v680
      %v1505 = vmul.f32 %v1497, %v681
      %vm1506 = vcmask 195712
      %v1507 = vsel %vm1506, %v1498, 0.0
      %v1508 = vrot.slane %v1507, 4
      %v1509 = vadd.f32 %v1507, %v1508
      %v1510 = vrot.slane %v1509, 2
      %v1511 = vadd.f32 %v1509, %v1510
      %v1512 = vrot.slane %v1511, 1
      %v1513 = vadd.f32 %v1511, %v1512
      %v1514 = vsel %vm1506, %v1499, 0.0
      %v1515 = vrot.slane %v1514, 4
      %v1516 = vadd.f32 %v1514, %v1515
      %v1517 = vrot.slane %v1516, 2
      %v1518 = vadd.f32 %v1516, %v1517
      %v1519 = vrot.slane %v1518, 1
      %v1520 = vadd.f32 %v1518, %v1519
      %v1521 = vsel %vm1506, %v1500, 0.0
      %v1522 = vrot.slane %v1521, 4
      %v1523 = vadd.f32 %v1521, %v1522
      %v1524 = vrot.slane %v1523, 2
      %v1525 = vadd.f32 %v1523, %v1524
      %v1526 = vrot.slane %v1525, 1
      %v1527 = vadd.f32 %v1525, %v1526
      %v1528 = vsel %vm1506, %v1501, 0.0
      %v1529 = vrot.slane %v1528, 4
      %v1530 = vadd.f32 %v1528, %v1529
      %v1531 = vrot.slane %v1530, 2
      %v1532 = vadd.f32 %v1530, %v1531
      %v1533 = vrot.slane %v1532, 1
      %v1534 = vadd.f32 %v1532, %v1533
      %v1535 = vsel %vm1506, %v1502, 0.0
      %v1536 = vrot.slane %v1535, 4
      %v1537 = vadd.f32 %v1535, %v1536
      %v1538 = vrot.slane %v1537, 2
      %v1539 = vadd.f32 %v1537, %v1538
      %v1540 = vrot.slane %v1539, 1
      %v1541 = vadd.f32 %v1539, %v1540
      %v1542 = vsel %vm1506, %v1503, 0.0
      %v1543 = vrot.slane %v1542, 4
      %v1544 = vadd.f32 %v1542, %v1543
      %v1545 = vrot.slane %v1544, 2
      %v1546 = vadd.f32 %v1544, %v1545
      %v1547 = vrot.slane %v1546, 1
      %v1548 = vadd.f32 %v1546, %v1547
      %v1549 = vsel %vm1506, %v1504, 0.0
      %v1550 = vrot.slane %v1549, 4
      %v1551 = vadd.f32 %v1549, %v1550
      %v1552 = vrot.slane %v1551, 2
      %v1553 = vadd.f32 %v1551, %v1552
      %v1554 = vrot.slane %v1553, 1
      %v1555 = vadd.f32 %v1553, %v1554
      %v1556 = vsel %vm1506, %v1505, 0.0
      %v1557 = vrot.slane %v1556, 4
      %v1558 = vadd.f32 %v1556, %v1557
      %v1559 = vrot.slane %v1558, 2
      %v1560 = vadd.f32 %v1558, %v1559
      %v1561 = vrot.slane %v1560, 1
      %v1562 = vadd.f32 %v1560, %v1561
      %1563 = vrot.lane.b32.xlu0 %v825, 104
      %v1564 = vpop.permute.xlu0 %1563
      %1565 = vrot.lane.b32.xlu0 %v826, 104
      %v1566 = vpop.permute.xlu0 %1565
      %1567 = vrot.lane.b32.xlu0 %v827, 104
      %v1568 = vpop.permute.xlu0 %1567
      %1569 = vrot.lane.b32.xlu0 %v828, 104
      %v1570 = vpop.permute.xlu0 %1569
      %1571 = vrot.lane.b32.xlu0 %v829, 104
      %v1572 = vpop.permute.xlu0 %1571
      %1573 = vrot.lane.b32.xlu0 %v830, 104
      %v1574 = vpop.permute.xlu0 %1573
      %1575 = vrot.lane.b32.xlu0 %v831, 104
      %v1576 = vpop.permute.xlu0 %1575
      %1577 = vrot.lane.b32.xlu0 %v832, 104
      %v1578 = vpop.permute.xlu0 %1577
      %v1587 = vsel %vm179, %v1564, 0.0
      %1588 = vadd.xlane.f32.xlu0 %v1587
      %v1589 = vpop.xlane.xlu0 %1588
      %v1590 = vsel %vm179, %v1566, 0.0
      %1591 = vadd.xlane.f32.xlu0 %v1590
      %v1592 = vpop.xlane.xlu0 %1591
      %v1593 = vsel %vm179, %v1568, 0.0
      %1594 = vadd.xlane.f32.xlu0 %v1593
      %v1595 = vpop.xlane.xlu0 %1594
      %v1596 = vsel %vm179, %v1570, 0.0
      %1597 = vadd.xlane.f32.xlu0 %v1596
      %v1598 = vpop.xlane.xlu0 %1597
      %v1599 = vsel %vm179, %v1572, 0.0
      %1600 = vadd.xlane.f32.xlu0 %v1599
      %v1601 = vpop.xlane.xlu0 %1600
      %v1602 = vsel %vm179, %v1574, 0.0
      %1603 = vadd.xlane.f32.xlu0 %v1602
      %v1604 = vpop.xlane.xlu0 %1603
      %v1605 = vsel %vm179, %v1576, 0.0
      %1606 = vadd.xlane.f32.xlu0 %v1605
      %v1607 = vpop.xlane.xlu0 %1606
      %v1608 = vsel %vm179, %v1578, 0.0
      %1609 = vadd.xlane.f32.xlu0 %v1608
      %v1610 = vpop.xlane.xlu0 %1609
      %v1611 = vrot.slane %v1589, 4
      %v1612 = vmax.f32 %v1589, %v1611
      %v1613 = vrot.slane %v1612, 2
      %v1614 = vmax.f32 %v1612, %v1613
      %v1615 = vrot.slane %v1614, 1
      %v1616 = vmax.f32 %v1614, %v1615
      %v1617 = vrot.slane %v1592, 4
      %v1618 = vmax.f32 %v1592, %v1617
      %v1619 = vrot.slane %v1618, 2
      %v1620 = vmax.f32 %v1618, %v1619
      %v1621 = vrot.slane %v1620, 1
      %v1622 = vmax.f32 %v1620, %v1621
      %v1623 = vrot.slane %v1595, 4
      %v1624 = vmax.f32 %v1595, %v1623
      %v1625 = vrot.slane %v1624, 2
      %v1626 = vmax.f32 %v1624, %v1625
      %v1627 = vrot.slane %v1626, 1
      %v1628 = vmax.f32 %v1626, %v1627
      %v1629 = vrot.slane %v1598, 4
      %v1630 = vmax.f32 %v1598, %v1629
      %v1631 = vrot.slane %v1630, 2
      %v1632 = vmax.f32 %v1630, %v1631
      %v1633 = vrot.slane %v1632, 1
      %v1634 = vmax.f32 %v1632, %v1633
      %v1635 = vrot.slane %v1601, 4
      %v1636 = vmax.f32 %v1601, %v1635
      %v1637 = vrot.slane %v1636, 2
      %v1638 = vmax.f32 %v1636, %v1637
      %v1639 = vrot.slane %v1638, 1
      %v1640 = vmax.f32 %v1638, %v1639
      %v1641 = vrot.slane %v1604, 4
      %v1642 = vmax.f32 %v1604, %v1641
      %v1643 = vrot.slane %v1642, 2
      %v1644 = vmax.f32 %v1642, %v1643
      %v1645 = vrot.slane %v1644, 1
      %v1646 = vmax.f32 %v1644, %v1645
      %v1647 = vrot.slane %v1607, 4
      %v1648 = vmax.f32 %v1607, %v1647
      %v1649 = vrot.slane %v1648, 2
      %v1650 = vmax.f32 %v1648, %v1649
      %v1651 = vrot.slane %v1650, 1
      %v1652 = vmax.f32 %v1650, %v1651
      %v1653 = vrot.slane %v1610, 4
      %v1654 = vmax.f32 %v1610, %v1653
      %v1655 = vrot.slane %v1654, 2
      %v1656 = vmax.f32 %v1654, %v1655
      %v1657 = vrot.slane %v1656, 1
      %v1658 = vmax.f32 %v1656, %v1657
      %v1659 = vsub.f32 %v1589, %v1616
      %v1660 = vsub.f32 %v1592, %v1622
      %v1661 = vsub.f32 %v1595, %v1628
      %v1662 = vsub.f32 %v1598, %v1634
      %v1663 = vsub.f32 %v1601, %v1640
      %v1664 = vsub.f32 %v1604, %v1646
      %v1665 = vsub.f32 %v1607, %v1652
      %v1666 = vsub.f32 %v1610, %v1658
      %v1667 = vmul.f32 %v1659, 1.442695
      %v1668 = vpow.pop %v1667
      %v1669 = vmul.f32 %v1660, 1.442695
      %v1670 = vpow.pop %v1669
      %v1671 = vmul.f32 %v1661, 1.442695
      %v1672 = vpow.pop %v1671
      %v1673 = vmul.f32 %v1662, 1.442695
      %v1674 = vpow.pop %v1673
      %v1675 = vmul.f32 %v1663, 1.442695
      %v1676 = vpow.pop %v1675
      %v1677 = vmul.f32 %v1664, 1.442695
      %v1678 = vpow.pop %v1677
      %v1679 = vmul.f32 %v1665, 1.442695
      %v1680 = vpow.pop %v1679
      %v1681 = vmul.f32 %v1666, 1.442695
      %v1682 = vpow.pop %v1681
      %v1683 = vrot.slane %v1668, 4
      %v1684 = vadd.f32 %v1668, %v1683
      %v1685 = vrot.slane %v1684, 2
      %v1686 = vadd.f32 %v1684, %v1685
      %v1687 = vrot.slane %v1686, 1
      %v1688 = vadd.f32 %v1686, %v1687
      %v1689 = vrot.slane %v1670, 4
      %v1690 = vadd.f32 %v1670, %v1689
      %v1691 = vrot.slane %v1690, 2
      %v1692 = vadd.f32 %v1690, %v1691
      %v1693 = vrot.slane %v1692, 1
      %v1694 = vadd.f32 %v1692, %v1693
      %v1695 = vrot.slane %v1672, 4
      %v1696 = vadd.f32 %v1672, %v1695
      %v1697 = vrot.slane %v1696, 2
      %v1698 = vadd.f32 %v1696, %v1697
      %v1699 = vrot.slane %v1698, 1
      %v1700 = vadd.f32 %v1698, %v1699
      %v1701 = vrot.slane %v1674, 4
      %v1702 = vadd.f32 %v1674, %v1701
      %v1703 = vrot.slane %v1702, 2
      %v1704 = vadd.f32 %v1702, %v1703
      %v1705 = vrot.slane %v1704, 1
      %v1706 = vadd.f32 %v1704, %v1705
      %v1707 = vrot.slane %v1676, 4
      %v1708 = vadd.f32 %v1676, %v1707
      %v1709 = vrot.slane %v1708, 2
      %v1710 = vadd.f32 %v1708, %v1709
      %v1711 = vrot.slane %v1710, 1
      %v1712 = vadd.f32 %v1710, %v1711
      %v1713 = vrot.slane %v1678, 4
      %v1714 = vadd.f32 %v1678, %v1713
      %v1715 = vrot.slane %v1714, 2
      %v1716 = vadd.f32 %v1714, %v1715
      %v1717 = vrot.slane %v1716, 1
      %v1718 = vadd.f32 %v1716, %v1717
      %v1719 = vrot.slane %v1680, 4
      %v1720 = vadd.f32 %v1680, %v1719
      %v1721 = vrot.slane %v1720, 2
      %v1722 = vadd.f32 %v1720, %v1721
      %v1723 = vrot.slane %v1722, 1
      %v1724 = vadd.f32 %v1722, %v1723
      %v1725 = vrot.slane %v1682, 4
      %v1726 = vadd.f32 %v1682, %v1725
      %v1727 = vrot.slane %v1726, 2
      %v1728 = vadd.f32 %v1726, %v1727
      %v1729 = vrot.slane %v1728, 1
      %v1730 = vadd.f32 %v1728, %v1729
      %v1731 = vrcp.pop %v1688
      %v1732 = vmul.f32 %v1668, %v1731
      %v1733 = vrcp.pop %v1694
      %v1734 = vmul.f32 %v1670, %v1733
      %v1735 = vrcp.pop %v1700
      %v1736 = vmul.f32 %v1672, %v1735
      %v1737 = vrcp.pop %v1706
      %v1738 = vmul.f32 %v1674, %v1737
      %v1739 = vrcp.pop %v1712
      %v1740 = vmul.f32 %v1676, %v1739
      %v1741 = vrcp.pop %v1718
      %v1742 = vmul.f32 %v1678, %v1741
      %v1743 = vrcp.pop %v1724
      %v1744 = vmul.f32 %v1680, %v1743
      %v1745 = vrcp.pop %v1730
      %v1746 = vmul.f32 %v1682, %v1745
      %v1747 = vmul.f32 %v1732, %v674
      %v1748 = vmul.f32 %v1734, %v675
      %v1749 = vmul.f32 %v1736, %v676
      %v1750 = vmul.f32 %v1738, %v677
      %v1751 = vmul.f32 %v1740, %v678
      %v1752 = vmul.f32 %v1742, %v679
      %v1753 = vmul.f32 %v1744, %v680
      %v1754 = vmul.f32 %v1746, %v681
      %vm1755 = vcmask 261312
      %v1756 = vsel %vm1755, %v1747, 0.0
      %v1757 = vrot.slane %v1756, 4
      %v1758 = vadd.f32 %v1756, %v1757
      %v1759 = vrot.slane %v1758, 2
      %v1760 = vadd.f32 %v1758, %v1759
      %v1761 = vrot.slane %v1760, 1
      %v1762 = vadd.f32 %v1760, %v1761
      %v1763 = vsel %vm1755, %v1748, 0.0
      %v1764 = vrot.slane %v1763, 4
      %v1765 = vadd.f32 %v1763, %v1764
      %v1766 = vrot.slane %v1765, 2
      %v1767 = vadd.f32 %v1765, %v1766
      %v1768 = vrot.slane %v1767, 1
      %v1769 = vadd.f32 %v1767, %v1768
      %v1770 = vsel %vm1755, %v1749, 0.0
      %v1771 = vrot.slane %v1770, 4
      %v1772 = vadd.f32 %v1770, %v1771
      %v1773 = vrot.slane %v1772, 2
      %v1774 = vadd.f32 %v1772, %v1773
      %v1775 = vrot.slane %v1774, 1
      %v1776 = vadd.f32 %v1774, %v1775
      %v1777 = vsel %vm1755, %v1750, 0.0
      %v1778 = vrot.slane %v1777, 4
      %v1779 = vadd.f32 %v1777, %v1778
      %v1780 = vrot.slane %v1779, 2
      %v1781 = vadd.f32 %v1779, %v1780
      %v1782 = vrot.slane %v1781, 1
      %v1783 = vadd.f32 %v1781, %v1782
      %v1784 = vsel %vm1755, %v1751, 0.0
      %v1785 = vrot.slane %v1784, 4
      %v1786 = vadd.f32 %v1784, %v1785
      %v1787 = vrot.slane %v1786, 2
      %v1788 = vadd.f32 %v1786, %v1787
      %v1789 = vrot.slane %v1788, 1
      %v1790 = vadd.f32 %v1788, %v1789
      %v1791 = vsel %vm1755, %v1752, 0.0
      %v1792 = vrot.slane %v1791, 4
      %v1793 = vadd.f32 %v1791, %v1792
      %v1794 = vrot.slane %v1793, 2
      %v1795 = vadd.f32 %v1793, %v1794
      %v1796 = vrot.slane %v1795, 1
      %v1797 = vadd.f32 %v1795, %v1796
      %v1798 = vsel %vm1755, %v1753, 0.0
      %v1799 = vrot.slane %v1798, 4
      %v1800 = vadd.f32 %v1798, %v1799
      %v1801 = vrot.slane %v1800, 2
      %v1802 = vadd.f32 %v1800, %v1801
      %v1803 = vrot.slane %v1802, 1
      %v1804 = vadd.f32 %v1802, %v1803
      %v1805 = vsel %vm1755, %v1754, 0.0
      %v1806 = vrot.slane %v1805, 4
      %v1807 = vadd.f32 %v1805, %v1806
      %v1808 = vrot.slane %v1807, 2
      %v1809 = vadd.f32 %v1807, %v1808
      %v1810 = vrot.slane %v1809, 1
      %v1811 = vadd.f32 %v1809, %v1810
      %vm1820 = vcmask 1041409
      %v1821 = vsel %vm1820, %v1014, %v1007
      %vm1822 = vcmask 1042434
      %v1823 = vsel %vm1822, %v1021, %v1821
      %vm1824 = vcmask 1043459
      %v1825 = vsel %vm1824, %v1028, %v1823
      %vm1826 = vcmask 1044484
      %v1827 = vsel %vm1826, %v1035, %v1825
      %vm1828 = vcmask 1045509
      %v1829 = vsel %vm1828, %v1042, %v1827
      %vm1830 = vcmask 1046534
      %v1831 = vsel %vm1830, %v1049, %v1829
      %vm1832 = vcmask 1047559
      %v1833 = vsel %vm1832, %v1056, %v1831
      %v1843 = vsel %vm1820, %v1271, %v1264
      %v1844 = vsel %vm1822, %v1278, %v1843
      %v1845 = vsel %vm1824, %v1285, %v1844
      %v1846 = vsel %vm1826, %v1292, %v1845
      %v1847 = vsel %vm1828, %v1299, %v1846
      %v1848 = vsel %vm1830, %v1306, %v1847
      %v1849 = vsel %vm1832, %v1313, %v1848
      %v1859 = vsel %vm1820, %v1520, %v1513
      %v1860 = vsel %vm1822, %v1527, %v1859
      %v1861 = vsel %vm1824, %v1534, %v1860
      %v1862 = vsel %vm1826, %v1541, %v1861
      %v1863 = vsel %vm1828, %v1548, %v1862
      %v1864 = vsel %vm1830, %v1555, %v1863
      %v1865 = vsel %vm1832, %v1562, %v1864
      %v1875 = vsel %vm1820, %v1769, %v1762
      %v1876 = vsel %vm1822, %v1776, %v1875
      %v1877 = vsel %vm1824, %v1783, %v1876
      %v1878 = vsel %vm1826, %v1790, %v1877
      %v1879 = vsel %vm1828, %v1797, %v1878
      %v1880 = vsel %vm1830, %v1804, %v1879
      %v1881 = vsel %vm1832, %v1811, %v1880
      %v1883 = vsel %vm179, %v1833, %v1849
      %vm1884 = vcmask 130048
      %v1885 = vsel %vm1884, %v1883, %v1865
      %vm1886 = vcmask 195584
      %v1887 = vsel %vm1886, %v1885, %v1881
      %v1888 = vld [vmem:[%s2 + $0x38] sm:$0xff]
      %v1889 = vld [vmem:[%s2 + $0x40] sm:$0xff]
      %v1890 = vld [vmem:[%s2 + $0x48] sm:$0xff]
      %v1891 = vld [vmem:[%s2 + $0x50] sm:$0xff]
      %v1892 = vld [vmem:[%s1 + $0x5] sm:$0x1]
      %v1893 = vlaneseq
      %v1894 = vshrl.u32 %v1893, 7
      %v1895 = vsub.s32 0, %v1894
      %v1896 = vrot.slane %v1892, %v1895
      %v1898 = vsel %vm446, %v1887, 0
      %1900 = vmatprep.subr.mxu0 0.0
      %1901 = vmatpush1.msra.mxu0 %v1888
      %1902 = vmatprep.subr.mxu0 0.0
      %1903 = vmatpush1.msra.mxu0 %v1889
      %1904 = vmatprep.subr.mxu0 0.0
      %1905 = vmatpush1.msra.mxu0 %v1890
      %1906 = vmatprep.subr.mxu0 0.0
      %1907 = vmatpush1.msra.mxu0 %v1891
      %1908 = vmatprep.subr.mxu0 0.0
      %1909 = vmatpush1.msra.mxu0 0.0
      %1910 = vmatprep.subr.mxu0 0.0
      %1911 = vmatpush1.msra.mxu0 0.0
      %1912 = vmatprep.subr.mxu0 0.0
      %1913 = vmatpush1.msra.mxu0 0.0
      %1914 = vmatprep.subr.mxu0 0.0
      %1915 = vmatpush1.msra.mxu0 0.0
      %1916 = vmatprep.subr.mxu0 0.0
      %1917 = vmatpush1.msra.mxu0 0.0
      %1918 = vmatprep.subr.mxu0 0.0
      %1919 = vmatpush1.msra.mxu0 0.0
      %1920 = vmatprep.subr.mxu0 0.0
      %1921 = vmatpush1.msra.mxu0 0.0
      %1922 = vmatprep.subr.mxu0 0.0
      %1923 = vmatpush1.msra.mxu0 0.0
      %1924 = vmatprep.subr.mxu0 0.0
      %1925 = vmatpush1.msra.mxu0 0.0
      %1926 = vmatprep.subr.mxu0 0.0
      %1927 = vmatpush1.msra.mxu0 0.0
      %1928 = vmatprep.subr.mxu0 0.0
      %1929 = vmatpush1.msra.mxu0 0.0
      %1930 = vmatprep.subr.mxu0 0.0
      %1931 = vmatpush1.msra.mxu0 0.0
      %1932 = vmatprep.subr.mxu0 0.0
      %1933 = vmatpush1.msra.mxu0 0.0
      %1934 = vmatprep.subr.mxu0 0.0
      %1935 = vmatpush1.msra.mxu0 0.0
      %1936 = vmatprep.subr.mxu0 0.0
      %1937 = vmatpush1.msra.mxu0 0.0
      %1938 = vmatprep.subr.mxu0 0.0
      %1939 = vmatpush1.msra.mxu0 0.0
      %1940 = vmatprep.subr.mxu0 0.0
      %1941 = vmatpush1.msra.mxu0 0.0
      %1942 = vmatprep.subr.mxu0 0.0
      %1943 = vmatpush1.msra.mxu0 0.0
      %1944 = vmatprep.subr.mxu0 0.0
      %1945 = vmatpush1.msra.mxu0 0.0
      %1946 = vmatprep.subr.mxu0 0.0
      %1947 = vmatpush1.msra.mxu0 0.0
      %1948 = vmatprep.subr.mxu0 0.0
      %1949 = vmatpush1.msra.mxu0 0.0
      %1950 = vmatprep.subr.mxu0 0.0
      %1951 = vmatpush1.msra.mxu0 0.0
      %1952 = vmatprep.subr.mxu0 0.0
      %1953 = vmatpush1.msra.mxu0 0.0
      %1954 = vmatprep.subr.mxu0 0.0
      %1955 = vmatpush1.msra.mxu0 0.0
      %1956 = vmatprep.subr.mxu0 0.0
      %1957 = vmatpush1.msra.mxu0 0.0
      %1958 = vmatprep.subr.mxu0 0.0
      %1959 = vmatpush1.msra.mxu0 0.0
      %1960 = vmatprep.subr.mxu0 0.0
      %1961 = vmatpush1.msra.mxu0 0.0
      %1962 = vmatprep.subr.mxu0 0.0
      %1963 = vmatpush1.msra.mxu0 0.0
      %1964 = vmatprep.mubr.f32.mxu0 0.0
      %1965 = vmatmul.mubr.f32.gmra.mrb[0].mxu0 %v1898
      %v1966 = vpop.f32.mrb[0].mxu0
      %v1967 = vadd.f32 %v1896, %v1966
      %v1968 = vpop.f32.mrb[0].mxu0
      %1969 = vdwg.mxu0
      %v1970 = vmax.f32 %v1967, 0.0
      %v1971 = vsel %vm1884, %v1970, 0.0
      %1972 = vadd.xlane.f32.xlu0 %v1971
      %v1973 = vpop.xlane.xlu0 %1972
      %v1974 = vrcp.pop 16.0
      %v1975 = vmul.f32 %v1973, %v1974
      %v1976 = vsub.f32 %v1970, %v1975
      %v1977 = vmul.f32 %v1976, %v1976
      %v1978 = vsel %vm1884, %v1977, 0.0
      %1979 = vadd.xlane.f32.xlu0 %v1978
      %v1980 = vpop.xlane.xlu0 %1979
      %v1981 = vmul.f32 %v1980, %v1974
      %v1982 = vadd.f32 %v1981, 1e-05
      %v1983 = vrsqrt.pop %v1982
      %v1984 = vmul.f32 %v1976, %v1983
      %v1985 = vld [vmem:[%s1 + $0x6] sm:$0x1]
      %v1986 = vlaneseq
      %v1987 = vshrl.u32 %v1986, 7
      %v1988 = vsub.s32 0, %v1987
      %v1989 = vrot.slane %v1985, %v1988
      %v1990 = vmul.f32 %v1984, %v1989
      %v1991 = vld [vmem:[%s1 + $0x7] sm:$0x1]
      %v1992 = vlaneseq
      %v1993 = vshrl.u32 %v1992, 7
      %v1994 = vsub.s32 0, %v1993
      %v1995 = vrot.slane %v1991, %v1994
      %v1996 = vadd.f32 %v1990, %v1995
      %v1997 = vld [vmem:[%s2 + $0x58] sm:$0xff]
      %v1998 = vld [vmem:[%s2 + $0x60] sm:$0xff]
      %v1999 = vld [vmem:[%s1 + $0x8] sm:$0x1]
      %v2000 = vlaneseq
      %v2001 = vshrl.u32 %v2000, 7
      %v2002 = vsub.s32 0, %v2001
      %v2003 = vrot.slane %v1999, %v2002
      %v2005 = vsel %vm1884, %v1996, 0
      %2007 = vmatprep.subr.mxu0 0.0
      %2008 = vmatpush1.msra.mxu0 %v1997
      %2009 = vmatprep.subr.mxu0 0.0
      %2010 = vmatpush1.msra.mxu0 %v1998
      %2011 = vmatprep.subr.mxu0 0.0
      %2012 = vmatpush1.msra.mxu0 0.0
      %2013 = vmatprep.subr.mxu0 0.0
      %2014 = vmatpush1.msra.mxu0 0.0
      %2015 = vmatprep.subr.mxu0 0.0
      %2016 = vmatpush1.msra.mxu0 0.0
      %2017 = vmatprep.subr.mxu0 0.0
      %2018 = vmatpush1.msra.mxu0 0.0
      %2019 = vmatprep.subr.mxu0 0.0
      %2020 = vmatpush1.msra.mxu0 0.0
      %2021 = vmatprep.subr.mxu0 0.0
      %2022 = vmatpush1.msra.mxu0 0.0
      %2023 = vmatprep.subr.mxu0 0.0
      %2024 = vmatpush1.msra.mxu0 0.0
      %2025 = vmatprep.subr.mxu0 0.0
      %2026 = vmatpush1.msra.mxu0 0.0
      %2027 = vmatprep.subr.mxu0 0.0
      %2028 = vmatpush1.msra.mxu0 0.0
      %2029 = vmatprep.subr.mxu0 0.0
      %2030 = vmatpush1.msra.mxu0 0.0
      %2031 = vmatprep.subr.mxu0 0.0
      %2032 = vmatpush1.msra.mxu0 0.0
      %2033 = vmatprep.subr.mxu0 0.0
      %2034 = vmatpush1.msra.mxu0 0.0
      %2035 = vmatprep.subr.mxu0 0.0
      %2036 = vmatpush1.msra.mxu0 0.0
      %2037 = vmatprep.subr.mxu0 0.0
      %2038 = vmatpush1.msra.mxu0 0.0
      %2039 = vmatprep.subr.mxu0 0.0
      %2040 = vmatpush1.msra.mxu0 0.0
      %2041 = vmatprep.subr.mxu0 0.0
      %2042 = vmatpush1.msra.mxu0 0.0
      %2043 = vmatprep.subr.mxu0 0.0
      %2044 = vmatpush1.msra.mxu0 0.0
      %2045 = vmatprep.subr.mxu0 0.0
      %2046 = vmatpush1.msra.mxu0 0.0
      %2047 = vmatprep.subr.mxu0 0.0
      %2048 = vmatpush1.msra.mxu0 0.0
      %2049 = vmatprep.subr.mxu0 0.0
      %2050 = vmatpush1.msra.mxu0 0.0
      %2051 = vmatprep.subr.mxu0 0.0
      %2052 = vmatpush1.msra.mxu0 0.0
      %2053 = vmatprep.subr.mxu0 0.0
      %2054 = vmatpush1.msra.mxu0 0.0
      %2055 = vmatprep.subr.mxu0 0.0
      %2056 = vmatpush1.msra.mxu0 0.0
      %2057 = vmatprep.subr.mxu0 0.0
      %2058 = vmatpush1.msra.mxu0 0.0
      %2059 = vmatprep.subr.mxu0 0.0
      %2060 = vmatpush1.msra.mxu0 0.0
      %2061 = vmatprep.subr.mxu0 0.0
      %2062 = vmatpush1.msra.mxu0 0.0
      %2063 = vmatprep.subr.mxu0 0.0
      %2064 = vmatpush1.msra.mxu0 0.0
      %2065 = vmatprep.subr.mxu0 0.0
      %2066 = vmatpush1.msra.mxu0 0.0
      %2067 = vmatprep.subr.mxu0 0.0
      %2068 = vmatpush1.msra.mxu0 0.0
      %2069 = vmatprep.subr.mxu0 0.0
      %2070 = vmatpush1.msra.mxu0 0.0
      %2071 = vmatprep.mubr.f32.mxu0 0.0
      %2072 = vmatmul.mubr.f32.gmra.mrb[0].mxu0 %v2005
      %v2073 = vpop.f32.mrb[0].mxu0
      %v2074 = vadd.f32 %v2003, %v2073
      %v2075 = vpop.f32.mrb[0].mxu0
      %2076 = vdwg.mxu0
      %v2077 = vmax.f32 %v2074, 0.0
      %v2078 = vld [vmem:[%s2 + $0x68] sm:$0xff]
      %v2079 = vld [vmem:[%s2 + $0x70] sm:$0xff]
      %v2080 = vld [vmem:[%s1 + $0x9] sm:$0x1]
      %v2081 = vlaneseq
      %v2082 = vshrl.u32 %v2081, 7
      %v2083 = vsub.s32 0, %v2082
      %v2084 = vrot.slane %v2080, %v2083
      %v2086 = vsel %vm1884, %v2077, 0
      %2088 = vmatprep.subr.mxu0 0.0
      %2089 = vmatpush1.msra.mxu0 %v2078
      %2090 = vmatprep.subr.mxu0 0.0
      %2091 = vmatpush1.msra.mxu0 %v2079
      %2092 = vmatprep.subr.mxu0 0.0
      %2093 = vmatpush1.msra.mxu0 0.0
      %2094 = vmatprep.subr.mxu0 0.0
      %2095 = vmatpush1.msra.mxu0 0.0
      %2096 = vmatprep.subr.mxu0 0.0
      %2097 = vmatpush1.msra.mxu0 0.0
      %2098 = vmatprep.subr.mxu0 0.0
      %2099 = vmatpush1.msra.mxu0 0.0
      %2100 = vmatprep.subr.mxu0 0.0
      %2101 = vmatpush1.msra.mxu0 0.0
      %2102 = vmatprep.subr.mxu0 0.0
      %2103 = vmatpush1.msra.mxu0 0.0
      %2104 = vmatprep.subr.mxu0 0.0
      %2105 = vmatpush1.msra.mxu0 0.0
      %2106 = vmatprep.subr.mxu0 0.0
      %2107 = vmatpush1.msra.mxu0 0.0
      %2108 = vmatprep.subr.mxu0 0.0
      %2109 = vmatpush1.msra.mxu0 0.0
      %2110 = vmatprep.subr.mxu0 0.0
      %2111 = vmatpush1.msra.mxu0 0.0
      %2112 = vmatprep.subr.mxu0 0.0
      %2113 = vmatpush1.msra.mxu0 0.0
      %2114 = vmatprep.subr.mxu0 0.0
      %2115 = vmatpush1.msra.mxu0 0.0
      %2116 = vmatprep.subr.mxu0 0.0
      %2117 = vmatpush1.msra.mxu0 0.0
      %2118 = vmatprep.subr.mxu0 0.0
      %2119 = vmatpush1.msra.mxu0 0.0
      %2120 = vmatprep.subr.mxu0 0.0
      %2121 = vmatpush1.msra.mxu0 0.0
      %2122 = vmatprep.subr.mxu0 0.0
      %2123 = vmatpush1.msra.mxu0 0.0
      %2124 = vmatprep.subr.mxu0 0.0
      %2125 = vmatpush1.msra.mxu0 0.0
      %2126 = vmatprep.subr.mxu0 0.0
      %2127 = vmatpush1.msra.mxu0 0.0
      %2128 = vmatprep.subr.mxu0 0.0
      %2129 = vmatpush1.msra.mxu0 0.0
      %2130 = vmatprep.subr.mxu0 0.0
      %2131 = vmatpush1.msra.mxu0 0.0
      %2132 = vmatprep.subr.mxu0 0.0
      %2133 = vmatpush1.msra.mxu0 0.0
      %2134 = vmatprep.subr.mxu0 0.0
      %2135 = vmatpush1.msra.mxu0 0.0
      %2136 = vmatprep.subr.mxu0 0.0
      %2137 = vmatpush1.msra.mxu0 0.0
      %2138 = vmatprep.subr.mxu0 0.0
      %2139 = vmatpush1.msra.mxu0 0.0
      %2140 = vmatprep.subr.mxu0 0.0
      %2141 = vmatpush1.msra.mxu0 0.0
      %2142 = vmatprep.subr.mxu0 0.0
      %2143 = vmatpush1.msra.mxu0 0.0
      %2144 = vmatprep.subr.mxu0 0.0
      %2145 = vmatpush1.msra.mxu0 0.0
      %2146 = vmatprep.subr.mxu0 0.0
      %2147 = vmatpush1.msra.mxu0 0.0
      %2148 = vmatprep.subr.mxu0 0.0
      %2149 = vmatpush1.msra.mxu0 0.0
      %2150 = vmatprep.subr.mxu0 0.0
      %2151 = vmatpush1.msra.mxu0 0.0
      %2152 = vmatprep.mubr.f32.mxu0 0.0
      %2153 = vmatmul.mubr.f32.gmra.mrb[0].mxu0 %v2086
      %v2154 = vpop.f32.mrb[0].mxu0
      %v2155 = vadd.f32 %v2084, %v2154
      %v2156 = vpop.f32.mrb[0].mxu0
      %2157 = vdwg.mxu0
      %2158 = vst [vmem:[%s170] sm:$0xff] %v2155
      %p2159 = scmp.lt.s32.totalorder %s14, 1
      %s2160 = scalar_select %p2159, %s14, 1
      %s2161 = smul.addr %s2160, 8
      %s2162 = scalar_lea.vmem %s3, %s2161
      // Predicated region
      $region33: #{forward.1} parent=31 // pred_check
        %p2163 = pneg %p100
      $region34: #{forward.1} parent=31 // pred_check_branch
        %2165 = sbr.rel (%p2163) target = $region36
      $region35: #{forward.1} parent=31 // pred_region
        _
      $region36: #{forward.1} parent=31 // pred_fallthru
        _
    $region32: #{forward.1} parent=5 // pred_fallthru
      _
    %p2166 = scmp.le.s32.totalorder 2, %s9
    // Predicated region
    $region37: #{forward.1} parent=5 // pred_check
      %p2167 = pneg %p2166
    $region38: #{forward.1} parent=5 // pred_check_branch
      %2169 = sbr.rel (%p2167) target = $region40
    $region39: #{forward.1} parent=5 // pred_region
      %s2170 = ssub.s32 %s9, 2
      // Predicated region
      $region41: #{forward.1} parent=39 // pred_check
        %p2171 = pneg %p106
      $region42: #{forward.1} parent=39 // pred_check_branch
        %2173 = sbr.rel (%p2171) target = $region44
      $region43: #{forward.1} parent=39 // pred_region
        %p2174 = scmp.lt.s32.totalorder %s15, 1
        %s2175 = scalar_select %p2174, %s15, 1
        %s2176 = smul.addr %s2175, 8
        %s2177 = scalar_lea.vmem %s3, %s2176
      $region44: #{forward.1} parent=39 // pred_fallthru
        _
    $region40: #{forward.1} parent=5 // pred_fallthru
      _
  $region6: #{forward.1} parent=0 // loop_footer
    %s13 = sadd.s32 1, %s9
  $region7: #{forward.1} parent=0 // loop_footer_branch
    %8 = sbr.rel target = $region3
  $region8: #{forward.1} parent=0 // loop_exit
    _

</llo_original>
